<compile_context>
chip_gen: v7x
topology: tpu7x:2x2x1
jax: 0.10.0
libtpu: 0.0.40
codegen_flags: <defaults>
</compile_context>

<pallas_src>
import functools

import jax
import jax.numpy as jnp
from jax import lax
from jax.experimental import pallas as pl
from jax.experimental.pallas import tpu as pltpu


def _cross_attention_kernel(x_ref, y_ref, wq_ref, wk_ref, wv_ref, wo_ref,
                            bo_ref, o_ref, *, heads, dim_head, B, Nq, Nk):
    """Single-invocation fused CrossAttention forward.

    x_ref : (B*Nq, dim)          bf16  (batch folded into rows)
    y_ref : (B*Nk, dim)          bf16
    wq_ref: (dim, inner)         bf16  (softmax scale pre-folded)
    wk_ref: (dim, inner)         bf16
    wv_ref: (dim, inner)         bf16
    wo_ref: (heads, dh, dim)     bf16  (per-head stack on leading axis)
    bo_ref: (1, dim)             f32
    o_ref : (B*Nq, dim)
    """
    x = x_ref[...]                      # (B*Nq, dim) bf16
    y = y_ref[...]                      # (B*Nk, dim) bf16
    dim = x.shape[-1]
    cdt = x.dtype                       # MXU input dtype (bf16)
    dh = dim_head

    # Fused projections across all heads: 3 wide MXU dots, f32 results.
    q = jnp.dot(x, wq_ref[...], preferred_element_type=jnp.float32)  # (B*Nq, inner)
    k = jnp.dot(y, wk_ref[...], preferred_element_type=jnp.float32)  # (B*Nk, inner)
    v = jnp.dot(y, wv_ref[...], preferred_element_type=jnp.float32)  # (B*Nk, inner)

    # Single f32 accumulator; bias broadcast hoisted (added exactly once).
    acc = jnp.broadcast_to(bo_ref[...], (B * Nq, dim)).astype(jnp.float32)

    for h in range(heads):              # static unroll over heads
        wo_h = wo_ref[h]                # (dh, dim) leading-axis index, no lane slice

        o_rows = []
        for b in range(B):              # static unroll; 8-sublane aligned rows
            # Slice the f32 projections (clean sublane/lane selects), then
            # cast the small slices to bf16 for the MXU.
            q_b = q[b * Nq:(b + 1) * Nq, h * dh:(h + 1) * dh].astype(cdt)  # (Nq, dh)
            k_b = k[b * Nk:(b + 1) * Nk, h * dh:(h + 1) * dh].astype(cdt)  # (Nk, dh)
            v_b = v[b * Nk:(b + 1) * Nk, h * dh:(h + 1) * dh].astype(cdt)  # (Nk, dh)

            # q @ k^T as an NT dot_general with bf16 operands (f32 acc).
            s = lax.dot_general(q_b, k_b, (((1,), (1,)), ((), ())),
                                preferred_element_type=jnp.float32)        # (Nq, Nk)

            # Numerically-stable softmax, all in f32; EUP approx reciprocal.
            m = jnp.max(s, axis=-1, keepdims=True)
            e = jnp.exp(s - m)
            p = e * pl.reciprocal(jnp.sum(e, axis=-1, keepdims=True),
                                  approx=True)

            o_rows.append(jnp.dot(p.astype(cdt), v_b,
                                  preferred_element_type=jnp.float32))     # (Nq, dh)

        # Batch-hoisted output projection: one dot per head over all rows.
        o_slab = jnp.concatenate(o_rows, axis=0) if B > 1 else o_rows[0]   # (B*Nq, dh)
        acc = acc + jnp.dot(o_slab.astype(cdt), wo_h,
                            preferred_element_type=jnp.float32)            # (B*Nq, dim)

    o_ref[...] = acc.astype(o_ref.dtype)


def cross_attention(x, y, wq, wkv, wo, bo, *, heads, dim_head,
                    compute_dtype=jnp.bfloat16):
    """x: (B, Nq, dim), y: (B, Nk, dim); weights in nn.Linear-transposed form:
       wq (dim, inner), wkv (dim, 2*inner), wo (inner, dim), bo (dim,)."""
    B, Nq, dim = x.shape
    _, Nk, _ = y.shape
    inner = heads * dim_head
    scale = dim_head ** (-0.5)

    # ---- Host-side (XLA) one-time weight preprocessing (free plumbing) ----
    # Fold the softmax scale into W_q, split W_kv into contiguous W_k / W_v
    # (kept full-width for fused projections), and stack W_o per head on a
    # leading axis so the kernel never lane-slices a weight.
    wq_full = (wq * scale).astype(compute_dtype)                   # (dim, inner)
    wk_full = wkv[:, :inner].astype(compute_dtype)                 # (dim, inner)
    wv_full = wkv[:, inner:].astype(compute_dtype)                 # (dim, inner)
    wo_h = wo.reshape(heads, dim_head, dim).astype(compute_dtype)  # (H, dh, dim)

    x2 = x.reshape(B * Nq, dim).astype(compute_dtype)
    y2 = y.reshape(B * Nk, dim).astype(compute_dtype)
    bo2 = bo.reshape(1, dim).astype(jnp.float32)

    kernel = functools.partial(_cross_attention_kernel,
                               heads=heads, dim_head=dim_head,
                               B=B, Nq=Nq, Nk=Nk)

    vmem = pltpu.MemorySpace.VMEM
    out2 = pl.pallas_call(
        kernel,
        out_shape=jax.ShapeDtypeStruct((B * Nq, dim), x.dtype),
        in_specs=[pl.BlockSpec(memory_space=vmem) for _ in range(7)],
        out_specs=pl.BlockSpec(memory_space=vmem),
    )(x2, y2, wq_full, wk_full, wv_full, wo_h, bo2)
    return out2.reshape(B, Nq, dim)


def cross_attention_ref(x, y, wq, wkv, wo, bo, *, heads, dim_head):
    """Pure-JAX f32 reference matching the PyTorch forward (mask=None, p=0)."""
    B, Nq, dim = x.shape
    _, Nk, _ = y.shape
    inner = heads * dim_head
    scale = dim_head ** (-0.5)
    q = x @ wq                                    # (B, Nq, inner)
    kv = y @ wkv                                  # (B, Nk, 2*inner)
    k, v = kv[..., :inner], kv[..., inner:]

    def split_heads(t, n):
        return t.reshape(B, n, heads, dim_head).transpose(0, 2, 1, 3)

    qh, kh, vh = split_heads(q, Nq), split_heads(k, Nk), split_heads(v, Nk)
    dots = jnp.einsum('bhqd,bhkd->bhqk', qh, kh) * scale
    attn = jax.nn.softmax(dots, axis=-1)
    out = jnp.einsum('bhqk,bhkd->bhqd', attn, vh)
    out = out.transpose(0, 2, 1, 3).reshape(B, Nq, inner)
    return out @ wo + bo


if __name__ == "__main__":
    # Small, deterministic configuration.
    B, Nq, Nk = 2, 8, 8
    dim = 32
    heads = 4
    dim_head = 16
    inner = heads * dim_head

    key = jax.random.PRNGKey(0)
    kx, ky, k1, k2, k3, k4 = jax.random.split(key, 6)

    x = jax.random.normal(kx, (B, Nq, dim), dtype=jnp.float32)
    y = jax.random.normal(ky, (B, Nk, dim), dtype=jnp.float32)

    # Deterministic synthetic parameters (shapes follow the nn.Linear defs).
    wq = jax.random.normal(k1, (dim, inner), dtype=jnp.float32) * 0.05
    wkv = jax.random.normal(k2, (dim, 2 * inner), dtype=jnp.float32) * 0.05
    wo = jax.random.normal(k3, (inner, dim), dtype=jnp.float32) * 0.05
    bo = jax.random.normal(k4, (dim,), dtype=jnp.float32) * 0.05

    out = cross_attention(x, y, wq, wkv, wo, bo, heads=heads, dim_head=dim_head)
    out = jax.block_until_ready(out)

    ref = cross_attention_ref(x, y, wq, wkv, wo, bo, heads=heads, dim_head=dim_head)
    # bf16 MXU inputs + approx reciprocal -> looser tolerance than pure f32.
    assert jnp.allclose(out, ref, atol=2e-2, rtol=2e-2), "mismatch vs reference"

    # TODO(synk): optional attention mask (mask != None) is not implemented;
    # dropout=0.0 is a no-op, matching the module defaults.
    print("KERNEL_OK")
</pallas_src>

<mosaic_0001>
module attributes {stable_mosaic.version = 11 : i64} {
  func.func @_cross_attention_kernel(%arg0: memref<16x32xbf16, #tpu.memory_space<vmem>>, %arg1: memref<16x32xbf16, #tpu.memory_space<vmem>>, %arg2: memref<32x64xbf16, #tpu.memory_space<vmem>>, %arg3: memref<32x64xbf16, #tpu.memory_space<vmem>>, %arg4: memref<32x64xbf16, #tpu.memory_space<vmem>>, %arg5: memref<4x16x32xbf16, #tpu.memory_space<vmem>>, %arg6: memref<1x32xf32, #tpu.memory_space<vmem>>, %arg7: memref<16x32xf32, #tpu.memory_space<vmem>>) attributes {dimension_semantics = [], scalar_prefetch = 0 : i64, scratch_operands = 0 : i64, tpu.core_type = #tpu.core_type<tc>} {
    %c0 = arith.constant 0 : index
    %c0_0 = arith.constant 0 : index
    %0 = vector.load %arg0[%c0, %c0_0] : memref<16x32xbf16, #tpu.memory_space<vmem>>, vector<16x32xbf16>
    %c0_1 = arith.constant 0 : index
    %c0_2 = arith.constant 0 : index
    %1 = vector.load %arg1[%c0_1, %c0_2] : memref<16x32xbf16, #tpu.memory_space<vmem>>, vector<16x32xbf16>
    %c0_3 = arith.constant 0 : index
    %c0_4 = arith.constant 0 : index
    %2 = vector.load %arg2[%c0_3, %c0_4] : memref<32x64xbf16, #tpu.memory_space<vmem>>, vector<32x64xbf16>
    %cst = arith.constant dense<0.000000e+00> : vector<16x64xf32>
    %3 = tpu.matmul %0, %2, %cst {dimension_numbers = #tpu.dot_dimension_numbers<[1], [0], [0], [1], [0, 0, 1, 1], [], []>} : vector<16x32xbf16>, vector<32x64xbf16>, vector<16x64xf32> -> vector<16x64xf32>
    %c0_5 = arith.constant 0 : index
    %c0_6 = arith.constant 0 : index
    %4 = vector.load %arg3[%c0_5, %c0_6] : memref<32x64xbf16, #tpu.memory_space<vmem>>, vector<32x64xbf16>
    %cst_7 = arith.constant dense<0.000000e+00> : vector<16x64xf32>
    %5 = tpu.matmul %1, %4, %cst_7 {dimension_numbers = #tpu.dot_dimension_numbers<[1], [0], [0], [1], [0, 0, 1, 1], [], []>} : vector<16x32xbf16>, vector<32x64xbf16>, vector<16x64xf32> -> vector<16x64xf32>
    %c0_8 = arith.constant 0 : index
    %c0_9 = arith.constant 0 : index
    %6 = vector.load %arg4[%c0_8, %c0_9] : memref<32x64xbf16, #tpu.memory_space<vmem>>, vector<32x64xbf16>
    %cst_10 = arith.constant dense<0.000000e+00> : vector<16x64xf32>
    %7 = tpu.matmul %1, %6, %cst_10 {dimension_numbers = #tpu.dot_dimension_numbers<[1], [0], [0], [1], [0, 0, 1, 1], [], []>} : vector<16x32xbf16>, vector<32x64xbf16>, vector<16x64xf32> -> vector<16x64xf32>
    %c0_11 = arith.constant 0 : index
    %c0_12 = arith.constant 0 : index
    %8 = vector.load %arg6[%c0_11, %c0_12] : memref<1x32xf32, #tpu.memory_space<vmem>>, vector<1x32xf32>
    %9 = vector.shape_cast %8 : vector<1x32xf32> to vector<1x32xf32>
    %10 = vector.broadcast %9 : vector<1x32xf32> to vector<16x32xf32>
    %c0_13 = arith.constant 0 : index
    %c0_14 = arith.constant 0 : index
    %c0_15 = arith.constant 0 : index
    %11 = vector.load %arg5[%c0_13, %c0_14, %c0_15] : memref<4x16x32xbf16, #tpu.memory_space<vmem>>, vector<1x16x32xbf16>
    %12 = vector.shape_cast %11 : vector<1x16x32xbf16> to vector<16x32xbf16>
    %13 = vector.extract_strided_slice %3 {offsets = [0, 0], sizes = [8, 16], strides = [1, 1]} : vector<16x64xf32> to vector<8x16xf32>
    %14 = arith.truncf %13 : vector<8x16xf32> to vector<8x16xbf16>
    %15 = vector.extract_strided_slice %5 {offsets = [0, 0], sizes = [8, 16], strides = [1, 1]} : vector<16x64xf32> to vector<8x16xf32>
    %16 = arith.truncf %15 : vector<8x16xf32> to vector<8x16xbf16>
    %17 = vector.extract_strided_slice %7 {offsets = [0, 0], sizes = [8, 16], strides = [1, 1]} : vector<16x64xf32> to vector<8x16xf32>
    %18 = arith.truncf %17 : vector<8x16xf32> to vector<8x16xbf16>
    %cst_16 = arith.constant dense<0.000000e+00> : vector<8x8xf32>
    %19 = tpu.matmul %14, %16, %cst_16 {dimension_numbers = #tpu.dot_dimension_numbers<[1], [1], [0], [0], [0, 0, 1, 0], [], []>} : vector<8x16xbf16>, vector<8x16xbf16>, vector<8x8xf32> -> vector<8x8xf32>
    %cst_17 = arith.constant dense<0xFF800000> : vector<8xf32>
    %20 = vector.multi_reduction <maximumf>, %19, %cst_17 [1] : vector<8x8xf32> to vector<8xf32>
    %21 = vector.shape_cast %20 : vector<8xf32> to vector<8x1xf32>
    %22 = vector.broadcast %21 : vector<8x1xf32> to vector<8x8xf32>
    %23 = arith.subf %19, %22 : vector<8x8xf32>
    %24 = math.exp %23 : vector<8x8xf32>
    %cst_18 = arith.constant dense<0.000000e+00> : vector<8xf32>
    %25 = vector.multi_reduction <add>, %24, %cst_18 [1] : vector<8x8xf32> to vector<8xf32>
    %26 = vector.shape_cast %25 : vector<8xf32> to vector<8x1xf32>
    %27 = tpu.reciprocal %26 {approx = true} : vector<8x1xf32> -> vector<8x1xf32>
    %28 = vector.broadcast %27 : vector<8x1xf32> to vector<8x8xf32>
    %29 = arith.mulf %24, %28 : vector<8x8xf32>
    %30 = arith.truncf %29 : vector<8x8xf32> to vector<8x8xbf16>
    %cst_19 = arith.constant dense<0.000000e+00> : vector<8x16xf32>
    %31 = tpu.matmul %30, %18, %cst_19 {dimension_numbers = #tpu.dot_dimension_numbers<[1], [0], [0], [1], [0, 0, 1, 1], [], []>} : vector<8x8xbf16>, vector<8x16xbf16>, vector<8x16xf32> -> vector<8x16xf32>
    %32 = vector.extract_strided_slice %3 {offsets = [8, 0], sizes = [8, 16], strides = [1, 1]} : vector<16x64xf32> to vector<8x16xf32>
    %33 = arith.truncf %32 : vector<8x16xf32> to vector<8x16xbf16>
    %34 = vector.extract_strided_slice %5 {offsets = [8, 0], sizes = [8, 16], strides = [1, 1]} : vector<16x64xf32> to vector<8x16xf32>
    %35 = arith.truncf %34 : vector<8x16xf32> to vector<8x16xbf16>
    %36 = vector.extract_strided_slice %7 {offsets = [8, 0], sizes = [8, 16], strides = [1, 1]} : vector<16x64xf32> to vector<8x16xf32>
    %37 = arith.truncf %36 : vector<8x16xf32> to vector<8x16xbf16>
    %cst_20 = arith.constant dense<0.000000e+00> : vector<8x8xf32>
    %38 = tpu.matmul %33, %35, %cst_20 {dimension_numbers = #tpu.dot_dimension_numbers<[1], [1], [0], [0], [0, 0, 1, 0], [], []>} : vector<8x16xbf16>, vector<8x16xbf16>, vector<8x8xf32> -> vector<8x8xf32>
    %cst_21 = arith.constant dense<0xFF800000> : vector<8xf32>
    %39 = vector.multi_reduction <maximumf>, %38, %cst_21 [1] : vector<8x8xf32> to vector<8xf32>
    %40 = vector.shape_cast %39 : vector<8xf32> to vector<8x1xf32>
    %41 = vector.broadcast %40 : vector<8x1xf32> to vector<8x8xf32>
    %42 = arith.subf %38, %41 : vector<8x8xf32>
    %43 = math.exp %42 : vector<8x8xf32>
    %cst_22 = arith.constant dense<0.000000e+00> : vector<8xf32>
    %44 = vector.multi_reduction <add>, %43, %cst_22 [1] : vector<8x8xf32> to vector<8xf32>
    %45 = vector.shape_cast %44 : vector<8xf32> to vector<8x1xf32>
    %46 = tpu.reciprocal %45 {approx = true} : vector<8x1xf32> -> vector<8x1xf32>
    %47 = vector.broadcast %46 : vector<8x1xf32> to vector<8x8xf32>
    %48 = arith.mulf %43, %47 : vector<8x8xf32>
    %49 = arith.truncf %48 : vector<8x8xf32> to vector<8x8xbf16>
    %cst_23 = arith.constant dense<0.000000e+00> : vector<8x16xf32>
    %50 = tpu.matmul %49, %37, %cst_23 {dimension_numbers = #tpu.dot_dimension_numbers<[1], [0], [0], [1], [0, 0, 1, 1], [], []>} : vector<8x8xbf16>, vector<8x16xbf16>, vector<8x16xf32> -> vector<8x16xf32>
    %51 = tpu.concatenate %31, %50 in 0 : vector<8x16xf32>, vector<8x16xf32> -> vector<16x16xf32>
    %52 = arith.truncf %51 : vector<16x16xf32> to vector<16x16xbf16>
    %cst_24 = arith.constant dense<0.000000e+00> : vector<16x32xf32>
    %53 = tpu.matmul %52, %12, %cst_24 {dimension_numbers = #tpu.dot_dimension_numbers<[1], [0], [0], [1], [0, 0, 1, 1], [], []>} : vector<16x16xbf16>, vector<16x32xbf16>, vector<16x32xf32> -> vector<16x32xf32>
    %54 = arith.addf %10, %53 : vector<16x32xf32>
    %c1 = arith.constant 1 : index
    %c0_25 = arith.constant 0 : index
    %c0_26 = arith.constant 0 : index
    %55 = vector.load %arg5[%c1, %c0_25, %c0_26] : memref<4x16x32xbf16, #tpu.memory_space<vmem>>, vector<1x16x32xbf16>
    %56 = vector.shape_cast %55 : vector<1x16x32xbf16> to vector<16x32xbf16>
    %57 = vector.extract_strided_slice %3 {offsets = [0, 16], sizes = [8, 16], strides = [1, 1]} : vector<16x64xf32> to vector<8x16xf32>
    %58 = arith.truncf %57 : vector<8x16xf32> to vector<8x16xbf16>
    %59 = vector.extract_strided_slice %5 {offsets = [0, 16], sizes = [8, 16], strides = [1, 1]} : vector<16x64xf32> to vector<8x16xf32>
    %60 = arith.truncf %59 : vector<8x16xf32> to vector<8x16xbf16>
    %61 = vector.extract_strided_slice %7 {offsets = [0, 16], sizes = [8, 16], strides = [1, 1]} : vector<16x64xf32> to vector<8x16xf32>
    %62 = arith.truncf %61 : vector<8x16xf32> to vector<8x16xbf16>
    %cst_27 = arith.constant dense<0.000000e+00> : vector<8x8xf32>
    %63 = tpu.matmul %58, %60, %cst_27 {dimension_numbers = #tpu.dot_dimension_numbers<[1], [1], [0], [0], [0, 0, 1, 0], [], []>} : vector<8x16xbf16>, vector<8x16xbf16>, vector<8x8xf32> -> vector<8x8xf32>
    %cst_28 = arith.constant dense<0xFF800000> : vector<8xf32>
    %64 = vector.multi_reduction <maximumf>, %63, %cst_28 [1] : vector<8x8xf32> to vector<8xf32>
    %65 = vector.shape_cast %64 : vector<8xf32> to vector<8x1xf32>
    %66 = vector.broadcast %65 : vector<8x1xf32> to vector<8x8xf32>
    %67 = arith.subf %63, %66 : vector<8x8xf32>
    %68 = math.exp %67 : vector<8x8xf32>
    %cst_29 = arith.constant dense<0.000000e+00> : vector<8xf32>
    %69 = vector.multi_reduction <add>, %68, %cst_29 [1] : vector<8x8xf32> to vector<8xf32>
    %70 = vector.shape_cast %69 : vector<8xf32> to vector<8x1xf32>
    %71 = tpu.reciprocal %70 {approx = true} : vector<8x1xf32> -> vector<8x1xf32>
    %72 = vector.broadcast %71 : vector<8x1xf32> to vector<8x8xf32>
    %73 = arith.mulf %68, %72 : vector<8x8xf32>
    %74 = arith.truncf %73 : vector<8x8xf32> to vector<8x8xbf16>
    %cst_30 = arith.constant dense<0.000000e+00> : vector<8x16xf32>
    %75 = tpu.matmul %74, %62, %cst_30 {dimension_numbers = #tpu.dot_dimension_numbers<[1], [0], [0], [1], [0, 0, 1, 1], [], []>} : vector<8x8xbf16>, vector<8x16xbf16>, vector<8x16xf32> -> vector<8x16xf32>
    %76 = vector.extract_strided_slice %3 {offsets = [8, 16], sizes = [8, 16], strides = [1, 1]} : vector<16x64xf32> to vector<8x16xf32>
    %77 = arith.truncf %76 : vector<8x16xf32> to vector<8x16xbf16>
    %78 = vector.extract_strided_slice %5 {offsets = [8, 16], sizes = [8, 16], strides = [1, 1]} : vector<16x64xf32> to vector<8x16xf32>
    %79 = arith.truncf %78 : vector<8x16xf32> to vector<8x16xbf16>
    %80 = vector.extract_strided_slice %7 {offsets = [8, 16], sizes = [8, 16], strides = [1, 1]} : vector<16x64xf32> to vector<8x16xf32>
    %81 = arith.truncf %80 : vector<8x16xf32> to vector<8x16xbf16>
    %cst_31 = arith.constant dense<0.000000e+00> : vector<8x8xf32>
    %82 = tpu.matmul %77, %79, %cst_31 {dimension_numbers = #tpu.dot_dimension_numbers<[1], [1], [0], [0], [0, 0, 1, 0], [], []>} : vector<8x16xbf16>, vector<8x16xbf16>, vector<8x8xf32> -> vector<8x8xf32>
    %cst_32 = arith.constant dense<0xFF800000> : vector<8xf32>
    %83 = vector.multi_reduction <maximumf>, %82, %cst_32 [1] : vector<8x8xf32> to vector<8xf32>
    %84 = vector.shape_cast %83 : vector<8xf32> to vector<8x1xf32>
    %85 = vector.broadcast %84 : vector<8x1xf32> to vector<8x8xf32>
    %86 = arith.subf %82, %85 : vector<8x8xf32>
    %87 = math.exp %86 : vector<8x8xf32>
    %cst_33 = arith.constant dense<0.000000e+00> : vector<8xf32>
    %88 = vector.multi_reduction <add>, %87, %cst_33 [1] : vector<8x8xf32> to vector<8xf32>
    %89 = vector.shape_cast %88 : vector<8xf32> to vector<8x1xf32>
    %90 = tpu.reciprocal %89 {approx = true} : vector<8x1xf32> -> vector<8x1xf32>
    %91 = vector.broadcast %90 : vector<8x1xf32> to vector<8x8xf32>
    %92 = arith.mulf %87, %91 : vector<8x8xf32>
    %93 = arith.truncf %92 : vector<8x8xf32> to vector<8x8xbf16>
    %cst_34 = arith.constant dense<0.000000e+00> : vector<8x16xf32>
    %94 = tpu.matmul %93, %81, %cst_34 {dimension_numbers = #tpu.dot_dimension_numbers<[1], [0], [0], [1], [0, 0, 1, 1], [], []>} : vector<8x8xbf16>, vector<8x16xbf16>, vector<8x16xf32> -> vector<8x16xf32>
    %95 = tpu.concatenate %75, %94 in 0 : vector<8x16xf32>, vector<8x16xf32> -> vector<16x16xf32>
    %96 = arith.truncf %95 : vector<16x16xf32> to vector<16x16xbf16>
    %cst_35 = arith.constant dense<0.000000e+00> : vector<16x32xf32>
    %97 = tpu.matmul %96, %56, %cst_35 {dimension_numbers = #tpu.dot_dimension_numbers<[1], [0], [0], [1], [0, 0, 1, 1], [], []>} : vector<16x16xbf16>, vector<16x32xbf16>, vector<16x32xf32> -> vector<16x32xf32>
    %98 = arith.addf %54, %97 : vector<16x32xf32>
    %c2 = arith.constant 2 : index
    %c0_36 = arith.constant 0 : index
    %c0_37 = arith.constant 0 : index
    %99 = vector.load %arg5[%c2, %c0_36, %c0_37] : memref<4x16x32xbf16, #tpu.memory_space<vmem>>, vector<1x16x32xbf16>
    %100 = vector.shape_cast %99 : vector<1x16x32xbf16> to vector<16x32xbf16>
    %101 = vector.extract_strided_slice %3 {offsets = [0, 32], sizes = [8, 16], strides = [1, 1]} : vector<16x64xf32> to vector<8x16xf32>
    %102 = arith.truncf %101 : vector<8x16xf32> to vector<8x16xbf16>
    %103 = vector.extract_strided_slice %5 {offsets = [0, 32], sizes = [8, 16], strides = [1, 1]} : vector<16x64xf32> to vector<8x16xf32>
    %104 = arith.truncf %103 : vector<8x16xf32> to vector<8x16xbf16>
    %105 = vector.extract_strided_slice %7 {offsets = [0, 32], sizes = [8, 16], strides = [1, 1]} : vector<16x64xf32> to vector<8x16xf32>
    %106 = arith.truncf %105 : vector<8x16xf32> to vector<8x16xbf16>
    %cst_38 = arith.constant dense<0.000000e+00> : vector<8x8xf32>
    %107 = tpu.matmul %102, %104, %cst_38 {dimension_numbers = #tpu.dot_dimension_numbers<[1], [1], [0], [0], [0, 0, 1, 0], [], []>} : vector<8x16xbf16>, vector<8x16xbf16>, vector<8x8xf32> -> vector<8x8xf32>
    %cst_39 = arith.constant dense<0xFF800000> : vector<8xf32>
    %108 = vector.multi_reduction <maximumf>, %107, %cst_39 [1] : vector<8x8xf32> to vector<8xf32>
    %109 = vector.shape_cast %108 : vector<8xf32> to vector<8x1xf32>
    %110 = vector.broadcast %109 : vector<8x1xf32> to vector<8x8xf32>
    %111 = arith.subf %107, %110 : vector<8x8xf32>
    %112 = math.exp %111 : vector<8x8xf32>
    %cst_40 = arith.constant dense<0.000000e+00> : vector<8xf32>
    %113 = vector.multi_reduction <add>, %112, %cst_40 [1] : vector<8x8xf32> to vector<8xf32>
    %114 = vector.shape_cast %113 : vector<8xf32> to vector<8x1xf32>
    %115 = tpu.reciprocal %114 {approx = true} : vector<8x1xf32> -> vector<8x1xf32>
    %116 = vector.broadcast %115 : vector<8x1xf32> to vector<8x8xf32>
    %117 = arith.mulf %112, %116 : vector<8x8xf32>
    %118 = arith.truncf %117 : vector<8x8xf32> to vector<8x8xbf16>
    %cst_41 = arith.constant dense<0.000000e+00> : vector<8x16xf32>
    %119 = tpu.matmul %118, %106, %cst_41 {dimension_numbers = #tpu.dot_dimension_numbers<[1], [0], [0], [1], [0, 0, 1, 1], [], []>} : vector<8x8xbf16>, vector<8x16xbf16>, vector<8x16xf32> -> vector<8x16xf32>
    %120 = vector.extract_strided_slice %3 {offsets = [8, 32], sizes = [8, 16], strides = [1, 1]} : vector<16x64xf32> to vector<8x16xf32>
    %121 = arith.truncf %120 : vector<8x16xf32> to vector<8x16xbf16>
    %122 = vector.extract_strided_slice %5 {offsets = [8, 32], sizes = [8, 16], strides = [1, 1]} : vector<16x64xf32> to vector<8x16xf32>
    %123 = arith.truncf %122 : vector<8x16xf32> to vector<8x16xbf16>
    %124 = vector.extract_strided_slice %7 {offsets = [8, 32], sizes = [8, 16], strides = [1, 1]} : vector<16x64xf32> to vector<8x16xf32>
    %125 = arith.truncf %124 : vector<8x16xf32> to vector<8x16xbf16>
    %cst_42 = arith.constant dense<0.000000e+00> : vector<8x8xf32>
    %126 = tpu.matmul %121, %123, %cst_42 {dimension_numbers = #tpu.dot_dimension_numbers<[1], [1], [0], [0], [0, 0, 1, 0], [], []>} : vector<8x16xbf16>, vector<8x16xbf16>, vector<8x8xf32> -> vector<8x8xf32>
    %cst_43 = arith.constant dense<0xFF800000> : vector<8xf32>
    %127 = vector.multi_reduction <maximumf>, %126, %cst_43 [1] : vector<8x8xf32> to vector<8xf32>
    %128 = vector.shape_cast %127 : vector<8xf32> to vector<8x1xf32>
    %129 = vector.broadcast %128 : vector<8x1xf32> to vector<8x8xf32>
    %130 = arith.subf %126, %129 : vector<8x8xf32>
    %131 = math.exp %130 : vector<8x8xf32>
    %cst_44 = arith.constant dense<0.000000e+00> : vector<8xf32>
    %132 = vector.multi_reduction <add>, %131, %cst_44 [1] : vector<8x8xf32> to vector<8xf32>
    %133 = vector.shape_cast %132 : vector<8xf32> to vector<8x1xf32>
    %134 = tpu.reciprocal %133 {approx = true} : vector<8x1xf32> -> vector<8x1xf32>
    %135 = vector.broadcast %134 : vector<8x1xf32> to vector<8x8xf32>
    %136 = arith.mulf %131, %135 : vector<8x8xf32>
    %137 = arith.truncf %136 : vector<8x8xf32> to vector<8x8xbf16>
    %cst_45 = arith.constant dense<0.000000e+00> : vector<8x16xf32>
    %138 = tpu.matmul %137, %125, %cst_45 {dimension_numbers = #tpu.dot_dimension_numbers<[1], [0], [0], [1], [0, 0, 1, 1], [], []>} : vector<8x8xbf16>, vector<8x16xbf16>, vector<8x16xf32> -> vector<8x16xf32>
    %139 = tpu.concatenate %119, %138 in 0 : vector<8x16xf32>, vector<8x16xf32> -> vector<16x16xf32>
    %140 = arith.truncf %139 : vector<16x16xf32> to vector<16x16xbf16>
    %cst_46 = arith.constant dense<0.000000e+00> : vector<16x32xf32>
    %141 = tpu.matmul %140, %100, %cst_46 {dimension_numbers = #tpu.dot_dimension_numbers<[1], [0], [0], [1], [0, 0, 1, 1], [], []>} : vector<16x16xbf16>, vector<16x32xbf16>, vector<16x32xf32> -> vector<16x32xf32>
    %142 = arith.addf %98, %141 : vector<16x32xf32>
    %c3 = arith.constant 3 : index
    %c0_47 = arith.constant 0 : index
    %c0_48 = arith.constant 0 : index
    %143 = vector.load %arg5[%c3, %c0_47, %c0_48] : memref<4x16x32xbf16, #tpu.memory_space<vmem>>, vector<1x16x32xbf16>
    %144 = vector.shape_cast %143 : vector<1x16x32xbf16> to vector<16x32xbf16>
    %145 = vector.extract_strided_slice %3 {offsets = [0, 48], sizes = [8, 16], strides = [1, 1]} : vector<16x64xf32> to vector<8x16xf32>
    %146 = arith.truncf %145 : vector<8x16xf32> to vector<8x16xbf16>
    %147 = vector.extract_strided_slice %5 {offsets = [0, 48], sizes = [8, 16], strides = [1, 1]} : vector<16x64xf32> to vector<8x16xf32>
    %148 = arith.truncf %147 : vector<8x16xf32> to vector<8x16xbf16>
    %149 = vector.extract_strided_slice %7 {offsets = [0, 48], sizes = [8, 16], strides = [1, 1]} : vector<16x64xf32> to vector<8x16xf32>
    %150 = arith.truncf %149 : vector<8x16xf32> to vector<8x16xbf16>
    %cst_49 = arith.constant dense<0.000000e+00> : vector<8x8xf32>
    %151 = tpu.matmul %146, %148, %cst_49 {dimension_numbers = #tpu.dot_dimension_numbers<[1], [1], [0], [0], [0, 0, 1, 0], [], []>} : vector<8x16xbf16>, vector<8x16xbf16>, vector<8x8xf32> -> vector<8x8xf32>
    %cst_50 = arith.constant dense<0xFF800000> : vector<8xf32>
    %152 = vector.multi_reduction <maximumf>, %151, %cst_50 [1] : vector<8x8xf32> to vector<8xf32>
    %153 = vector.shape_cast %152 : vector<8xf32> to vector<8x1xf32>
    %154 = vector.broadcast %153 : vector<8x1xf32> to vector<8x8xf32>
    %155 = arith.subf %151, %154 : vector<8x8xf32>
    %156 = math.exp %155 : vector<8x8xf32>
    %cst_51 = arith.constant dense<0.000000e+00> : vector<8xf32>
    %157 = vector.multi_reduction <add>, %156, %cst_51 [1] : vector<8x8xf32> to vector<8xf32>
    %158 = vector.shape_cast %157 : vector<8xf32> to vector<8x1xf32>
    %159 = tpu.reciprocal %158 {approx = true} : vector<8x1xf32> -> vector<8x1xf32>
    %160 = vector.broadcast %159 : vector<8x1xf32> to vector<8x8xf32>
    %161 = arith.mulf %156, %160 : vector<8x8xf32>
    %162 = arith.truncf %161 : vector<8x8xf32> to vector<8x8xbf16>
    %cst_52 = arith.constant dense<0.000000e+00> : vector<8x16xf32>
    %163 = tpu.matmul %162, %150, %cst_52 {dimension_numbers = #tpu.dot_dimension_numbers<[1], [0], [0], [1], [0, 0, 1, 1], [], []>} : vector<8x8xbf16>, vector<8x16xbf16>, vector<8x16xf32> -> vector<8x16xf32>
    %164 = vector.extract_strided_slice %3 {offsets = [8, 48], sizes = [8, 16], strides = [1, 1]} : vector<16x64xf32> to vector<8x16xf32>
    %165 = arith.truncf %164 : vector<8x16xf32> to vector<8x16xbf16>
    %166 = vector.extract_strided_slice %5 {offsets = [8, 48], sizes = [8, 16], strides = [1, 1]} : vector<16x64xf32> to vector<8x16xf32>
    %167 = arith.truncf %166 : vector<8x16xf32> to vector<8x16xbf16>
    %168 = vector.extract_strided_slice %7 {offsets = [8, 48], sizes = [8, 16], strides = [1, 1]} : vector<16x64xf32> to vector<8x16xf32>
    %169 = arith.truncf %168 : vector<8x16xf32> to vector<8x16xbf16>
    %cst_53 = arith.constant dense<0.000000e+00> : vector<8x8xf32>
    %170 = tpu.matmul %165, %167, %cst_53 {dimension_numbers = #tpu.dot_dimension_numbers<[1], [1], [0], [0], [0, 0, 1, 0], [], []>} : vector<8x16xbf16>, vector<8x16xbf16>, vector<8x8xf32> -> vector<8x8xf32>
    %cst_54 = arith.constant dense<0xFF800000> : vector<8xf32>
    %171 = vector.multi_reduction <maximumf>, %170, %cst_54 [1] : vector<8x8xf32> to vector<8xf32>
    %172 = vector.shape_cast %171 : vector<8xf32> to vector<8x1xf32>
    %173 = vector.broadcast %172 : vector<8x1xf32> to vector<8x8xf32>
    %174 = arith.subf %170, %173 : vector<8x8xf32>
    %175 = math.exp %174 : vector<8x8xf32>
    %cst_55 = arith.constant dense<0.000000e+00> : vector<8xf32>
    %176 = vector.multi_reduction <add>, %175, %cst_55 [1] : vector<8x8xf32> to vector<8xf32>
    %177 = vector.shape_cast %176 : vector<8xf32> to vector<8x1xf32>
    %178 = tpu.reciprocal %177 {approx = true} : vector<8x1xf32> -> vector<8x1xf32>
    %179 = vector.broadcast %178 : vector<8x1xf32> to vector<8x8xf32>
    %180 = arith.mulf %175, %179 : vector<8x8xf32>
    %181 = arith.truncf %180 : vector<8x8xf32> to vector<8x8xbf16>
    %cst_56 = arith.constant dense<0.000000e+00> : vector<8x16xf32>
    %182 = tpu.matmul %181, %169, %cst_56 {dimension_numbers = #tpu.dot_dimension_numbers<[1], [0], [0], [1], [0, 0, 1, 1], [], []>} : vector<8x8xbf16>, vector<8x16xbf16>, vector<8x16xf32> -> vector<8x16xf32>
    %183 = tpu.concatenate %163, %182 in 0 : vector<8x16xf32>, vector<8x16xf32> -> vector<16x16xf32>
    %184 = arith.truncf %183 : vector<16x16xf32> to vector<16x16xbf16>
    %cst_57 = arith.constant dense<0.000000e+00> : vector<16x32xf32>
    %185 = tpu.matmul %184, %144, %cst_57 {dimension_numbers = #tpu.dot_dimension_numbers<[1], [0], [0], [1], [0, 0, 1, 1], [], []>} : vector<16x16xbf16>, vector<16x32xbf16>, vector<16x32xf32> -> vector<16x32xf32>
    %186 = arith.addf %142, %185 : vector<16x32xf32>
    %c0_58 = arith.constant 0 : index
    %c0_59 = arith.constant 0 : index
    %187 = vector.load %arg7[%c0_58, %c0_59] : memref<16x32xf32, #tpu.memory_space<vmem>>, vector<16x32xf32>
    tpu.vector_store %arg7[%c0_58, %c0_59], %186 {strides = array<i32>} : memref<16x32xf32, #tpu.memory_space<vmem>>, vector<16x32xf32>,
    return
  }
}

</mosaic_0001>

<llo_original>
// kernel: tpu_custom_call.1
$region0: #{tpu_custom_call.1}
  #allocation0 [shape = 'u32[]', space=smem, size = 0x4, offset = 0x4, fixed_abs, tag = 'smem constant byte address 0x4 - core index']
  #allocation1 [shape = 'u32[144,128]{1,0:T(1,128)}', space=vmem, size = 0x12000, scoped, tag = 'internal scratch']
  %s0 = inlined_call_operand.hbm [shape: bf16[16,32], index: 0, kind: input, shape index: {}]
  %s1 = inlined_call_operand.hbm [shape: bf16[16,32], index: 1, kind: input, shape index: {}]
  %s2 = inlined_call_operand.hbm [shape: bf16[32,64], index: 2, kind: input, shape index: {}]
  %s3 = inlined_call_operand.hbm [shape: bf16[32,64], index: 3, kind: input, shape index: {}]
  %s4 = inlined_call_operand.hbm [shape: bf16[32,64], index: 4, kind: input, shape index: {}]
  %s5 = inlined_call_operand.hbm [shape: bf16[4,16,32], index: 5, kind: input, shape index: {}]
  %s6 = inlined_call_operand.vmem [shape: f32[1,32], index: 6, kind: input, shape index: {}]
  %s7 = inlined_call_operand.hbm [shape: f32[16,32], index: 7, kind: output, shape index: {}]
  %s8 = sld [smem:[#allocation0]]
  $region62: #{tpu_custom_call.1} parent=0
    _
  %s10 = ssub.s32 1, %s8
  %s11 = scalar_select 0, %s10, %s8
  $region1: #{tpu_custom_call.1} parent=0
    #allocation2 [shape = 'u8[4096]{0}', space=vmem, size = 0x1000, scoped, tag = 'input window, operand 0, single buffered']
    #allocation3 [shape = 's32[1]{0}', space=sflag, size = 0x4, scoped, tag = 'scoped memory for tpu_custom_call.1']
    #allocation4 [shape = 's32[1]{0}', space=sflag, size = 0x4, scoped, tag = 'scoped memory for tpu_custom_call.1']
    #allocation5 [shape = 'u8[4096]{0}', space=vmem, size = 0x1000, scoped, tag = 'input window, operand 1, single buffered']
    #allocation6 [shape = 's32[1]{0}', space=sflag, size = 0x4, scoped, tag = 'scoped memory for tpu_custom_call.1']
    #allocation7 [shape = 'u8[8192]{0}', space=vmem, size = 0x2000, scoped, tag = 'input window, operand 2, single buffered']
    #allocation8 [shape = 'u8[8192]{0}', space=vmem, size = 0x2000, scoped, tag = 'input window, operand 3, single buffered']
    #allocation9 [shape = 's32[1]{0}', space=sflag, size = 0x4, scoped, tag = 'scoped memory for tpu_custom_call.1']
    #allocation10 [shape = 'u8[8192]{0}', space=vmem, size = 0x2000, scoped, tag = 'input window, operand 4, single buffered']
    #allocation11 [shape = 'u8[16384]{0}', space=vmem, size = 0x4000, scoped, tag = 'input window, operand 5, single buffered']
    #allocation12 [shape = 's32[1]{0}', space=sflag, size = 0x4, scoped, tag = 'scoped memory for tpu_custom_call.1']
    #allocation13 [shape = 'u8[8192]{0}', space=vmem, size = 0x2000, scoped, tag = 'output window, operand 0, single buffered']
    %12 = vsyncpa [#allocation3], 0
    %13 = vsyncpa [#allocation6], 0
    %14 = vsyncpa [#allocation9], 0
    %15 = vsyncpa [#allocation12], 0
    %16 = vsyncpa [#allocation4], 0
    // Predicated region
    $region2: #{tpu_custom_call.1} parent=1 // pred_check
      _
    $region3: #{tpu_custom_call.1} parent=1 // pred_check_branch
      %18 = sbr.rel (0) target = $region5
    $region4: #{tpu_custom_call.1} parent=1 // pred_region
      %s20 = ssub.s32 128, 128
      %21 = vsyncadd [#allocation3], %s20
      %s22 = sshll.u32 [#allocation2], 4
      %s23 = int_to_ptr.vmem [resolvable:$true] %s22
      %28 = dma.hbm_to_vmem [thread:$0]  %s0, 128, %s23, [#allocation3], 64, 64, 4
    $region5: #{tpu_custom_call.1} parent=1 // pred_fallthru
      _
    // Predicated region
    $region6: #{tpu_custom_call.1} parent=1 // pred_check
      _
    $region7: #{tpu_custom_call.1} parent=1 // pred_check_branch
      %30 = sbr.rel (0) target = $region9
    $region8: #{tpu_custom_call.1} parent=1 // pred_region
      %s32 = ssub.s32 128, 128
      %33 = vsyncadd [#allocation6], %s32
      %s34 = sshll.u32 [#allocation5], 4
      %s35 = int_to_ptr.vmem [resolvable:$true] %s34
      %40 = dma.hbm_to_vmem [thread:$0]  %s1, 128, %s35, [#allocation6], 64, 64, 4
    $region9: #{tpu_custom_call.1} parent=1 // pred_fallthru
      _
    // Predicated region
    $region10: #{tpu_custom_call.1} parent=1 // pred_check
      _
    $region11: #{tpu_custom_call.1} parent=1 // pred_check_branch
      %42 = sbr.rel (0) target = $region13
    $region12: #{tpu_custom_call.1} parent=1 // pred_region
      %s44 = ssub.s32 256, 256
      %45 = vsyncadd [#allocation6], %s44
      %s46 = sshll.u32 [#allocation7], 4
      %s47 = int_to_ptr.vmem [resolvable:$true] %s46
      %52 = dma.hbm_to_vmem [thread:$0]  %s2, 256, %s47, [#allocation6], 64, 64, 4
    $region13: #{tpu_custom_call.1} parent=1 // pred_fallthru
      _
    // Predicated region
    $region14: #{tpu_custom_call.1} parent=1 // pred_check
      _
    $region15: #{tpu_custom_call.1} parent=1 // pred_check_branch
      %54 = sbr.rel (0) target = $region17
    $region16: #{tpu_custom_call.1} parent=1 // pred_region
      %s56 = ssub.s32 256, 256
      %57 = vsyncadd [#allocation9], %s56
      %s58 = sshll.u32 [#allocation8], 4
      %s59 = int_to_ptr.vmem [resolvable:$true] %s58
      %64 = dma.hbm_to_vmem [thread:$0]  %s3, 256, %s59, [#allocation9], 64, 64, 4
    $region17: #{tpu_custom_call.1} parent=1 // pred_fallthru
      _
    // Predicated region
    $region18: #{tpu_custom_call.1} parent=1 // pred_check
      _
    $region19: #{tpu_custom_call.1} parent=1 // pred_check_branch
      %66 = sbr.rel (0) target = $region21
    $region20: #{tpu_custom_call.1} parent=1 // pred_region
      %s68 = ssub.s32 256, 256
      %69 = vsyncadd [#allocation9], %s68
      %s70 = sshll.u32 [#allocation10], 4
      %s71 = int_to_ptr.vmem [resolvable:$true] %s70
      %76 = dma.hbm_to_vmem [thread:$0]  %s4, 256, %s71, [#allocation9], 64, 64, 4
    $region21: #{tpu_custom_call.1} parent=1 // pred_fallthru
      _
    // Predicated region
    $region22: #{tpu_custom_call.1} parent=1 // pred_check
      _
    $region23: #{tpu_custom_call.1} parent=1 // pred_check_branch
      %78 = sbr.rel (0) target = $region25
    $region24: #{tpu_custom_call.1} parent=1 // pred_region
      %s80 = ssub.s32 512, 512
      %81 = vsyncadd [#allocation12], %s80
      %s82 = sshll.u32 [#allocation11], 4
      %s83 = int_to_ptr.vmem [resolvable:$true] %s82
      %88 = dma.hbm_to_vmem [thread:$0]  %s5, 512, %s83, [#allocation12], 64, 64, 4
    $region25: #{tpu_custom_call.1} parent=1 // pred_fallthru
      _
    // Predicated region
    $region26: #{tpu_custom_call.1} parent=1 // pred_check
      _
    $region27: #{tpu_custom_call.1} parent=1 // pred_check_branch
      %90 = sbr.rel (0) target = $region29
    $region28: #{tpu_custom_call.1} parent=1 // pred_region
      _
    $region29: #{tpu_custom_call.1} parent=1 // pred_fallthru
      _
    // Predicated region
    $region30: #{tpu_custom_call.1} parent=1 // pred_check
      _
    $region31: #{tpu_custom_call.1} parent=1 // pred_check_branch
      %92 = sbr.rel (0) target = $region33
    $region32: #{tpu_custom_call.1} parent=1 // pred_region
      %93 = dma.done [#allocation3], 128
    $region33: #{tpu_custom_call.1} parent=1 // pred_fallthru
      _
    // Predicated region
    $region34: #{tpu_custom_call.1} parent=1 // pred_check
      _
    $region35: #{tpu_custom_call.1} parent=1 // pred_check_branch
      %95 = sbr.rel (0) target = $region37
    $region36: #{tpu_custom_call.1} parent=1 // pred_region
      %96 = dma.done [#allocation6], 128
    $region37: #{tpu_custom_call.1} parent=1 // pred_fallthru
      _
    // Predicated region
    $region38: #{tpu_custom_call.1} parent=1 // pred_check
      _
    $region39: #{tpu_custom_call.1} parent=1 // pred_check_branch
      %98 = sbr.rel (0) target = $region41
    $region40: #{tpu_custom_call.1} parent=1 // pred_region
      %99 = dma.done [#allocation6], 256
    $region41: #{tpu_custom_call.1} parent=1 // pred_fallthru
      _
    // Predicated region
    $region42: #{tpu_custom_call.1} parent=1 // pred_check
      _
    $region43: #{tpu_custom_call.1} parent=1 // pred_check_branch
      %101 = sbr.rel (0) target = $region45
    $region44: #{tpu_custom_call.1} parent=1 // pred_region
      %102 = dma.done [#allocation9], 256
    $region45: #{tpu_custom_call.1} parent=1 // pred_fallthru
      _
    // Predicated region
    $region46: #{tpu_custom_call.1} parent=1 // pred_check
      _
    $region47: #{tpu_custom_call.1} parent=1 // pred_check_branch
      %104 = sbr.rel (0) target = $region49
    $region48: #{tpu_custom_call.1} parent=1 // pred_region
      %105 = dma.done [#allocation9], 256
    $region49: #{tpu_custom_call.1} parent=1 // pred_fallthru
      _
    // Predicated region
    $region50: #{tpu_custom_call.1} parent=1 // pred_check
      _
    $region51: #{tpu_custom_call.1} parent=1 // pred_check_branch
      %107 = sbr.rel (0) target = $region53
    $region52: #{tpu_custom_call.1} parent=1 // pred_region
      %108 = dma.done [#allocation12], 512
    $region53: #{tpu_custom_call.1} parent=1 // pred_fallthru
      _
    %v110 = vld [vmem:[#allocation2] sm:$0xf]
    %v111 = vld [vmem:[#allocation2 + $0x4] sm:$0xf]
    %v112 = vld [vmem:[#allocation5] sm:$0xf]
    %v113 = vld [vmem:[#allocation5 + $0x4] sm:$0xf]
    %v114 = vld [vmem:[#allocation7] sm:$0xf]
    %v115 = vld [vmem:[#allocation7 + $0x4] sm:$0xf]
    %v116 = vld [vmem:[#allocation7 + $0x8] sm:$0xf]
    %v117 = vld [vmem:[#allocation7 + $0xc] sm:$0xf]
    %v120 = vunpack.c.l.b16 %v110
    %v121 = vunpack.c.l.b16 %v111
    %v122 = vpack.c.b16 %v121, %v120
    %v127 = vunpack.c.l.b16 %v114
    %v128 = vunpack.c.l.b16 %v115
    %v129 = vunpack.c.l.b16 %v116
    %v130 = vunpack.c.l.b16 %v117
    %v131 = vpack.c.b16 %v128, %v127
    %v132 = vpack.c.b16 %v130, %v129
    %vm135 = vcmask 261120
    %v137 = vsel %vm135, %v122, 0
    %139 = vmatprep.subr.bf16.mxu0 0
    %140 = vmatpush1.bf16.msra.mxu0 %v131
    %141 = vmatprep.subr.bf16.mxu0 0
    %142 = vmatpush1.bf16.msra.mxu0 %v132
    %143 = vmatprep.subr.bf16.mxu0 0
    %144 = vmatpush1.bf16.msra.mxu0 0
    %145 = vmatprep.subr.bf16.mxu0 0
    %146 = vmatpush1.bf16.msra.mxu0 0
    %147 = vmatprep.subr.bf16.mxu0 0
    %148 = vmatpush1.bf16.msra.mxu0 0
    %149 = vmatprep.subr.bf16.mxu0 0
    %150 = vmatpush1.bf16.msra.mxu0 0
    %151 = vmatprep.subr.bf16.mxu0 0
    %152 = vmatpush1.bf16.msra.mxu0 0
    %153 = vmatprep.subr.bf16.mxu0 0
    %154 = vmatpush1.bf16.msra.mxu0 0
    %155 = vmatprep.subr.bf16.mxu0 0
    %156 = vmatpush1.bf16.msra.mxu0 0
    %157 = vmatprep.subr.bf16.mxu0 0
    %158 = vmatpush1.bf16.msra.mxu0 0
    %159 = vmatprep.subr.bf16.mxu0 0
    %160 = vmatpush1.bf16.msra.mxu0 0
    %161 = vmatprep.subr.bf16.mxu0 0
    %162 = vmatpush1.bf16.msra.mxu0 0
    %163 = vmatprep.subr.bf16.mxu0 0
    %164 = vmatpush1.bf16.msra.mxu0 0
    %165 = vmatprep.subr.bf16.mxu0 0
    %166 = vmatpush1.bf16.msra.mxu0 0
    %167 = vmatprep.subr.bf16.mxu0 0
    %168 = vmatpush1.bf16.msra.mxu0 0
    %169 = vmatprep.subr.bf16.mxu0 0
    %170 = vmatpush1.bf16.msra.mxu0 0
    %171 = vmatprep.mubr.bf16.mxu0 0
    %172 = vmatmul.mubr.bf16.gmra.mrb[0].mxu0 %v137
    %v173 = vpop.f32.mrb[0].mxu0
    %v174 = vadd.f32 0.0, %v173
    %v175 = vpop.f32.mrb[0].mxu0
    %v176 = vpop.f32.mrb[0].mxu0
    %v177 = vadd.f32 0.0, %v176
    %v178 = vpop.f32.mrb[0].mxu0
    %179 = vdwg.mxu0
    %v180 = vld [vmem:[#allocation8] sm:$0xf]
    %v181 = vld [vmem:[#allocation8 + $0x4] sm:$0xf]
    %v182 = vld [vmem:[#allocation8 + $0x8] sm:$0xf]
    %v183 = vld [vmem:[#allocation8 + $0xc] sm:$0xf]
    %v186 = vunpack.c.l.b16 %v112
    %v187 = vunpack.c.l.b16 %v113
    %v188 = vpack.c.b16 %v187, %v186
    %v193 = vunpack.c.l.b16 %v180
    %v194 = vunpack.c.l.b16 %v181
    %v195 = vunpack.c.l.b16 %v182
    %v196 = vunpack.c.l.b16 %v183
    %v197 = vpack.c.b16 %v194, %v193
    %v198 = vpack.c.b16 %v196, %v195
    %v202 = vsel %vm135, %v188, 0
    %204 = vmatprep.subr.bf16.mxu0 0
    %205 = vmatpush1.bf16.msra.mxu0 %v197
    %206 = vmatprep.subr.bf16.mxu0 0
    %207 = vmatpush1.bf16.msra.mxu0 %v198
    %208 = vmatprep.subr.bf16.mxu0 0
    %209 = vmatpush1.bf16.msra.mxu0 0
    %210 = vmatprep.subr.bf16.mxu0 0
    %211 = vmatpush1.bf16.msra.mxu0 0
    %212 = vmatprep.subr.bf16.mxu0 0
    %213 = vmatpush1.bf16.msra.mxu0 0
    %214 = vmatprep.subr.bf16.mxu0 0
    %215 = vmatpush1.bf16.msra.mxu0 0
    %216 = vmatprep.subr.bf16.mxu0 0
    %217 = vmatpush1.bf16.msra.mxu0 0
    %218 = vmatprep.subr.bf16.mxu0 0
    %219 = vmatpush1.bf16.msra.mxu0 0
    %220 = vmatprep.subr.bf16.mxu0 0
    %221 = vmatpush1.bf16.msra.mxu0 0
    %222 = vmatprep.subr.bf16.mxu0 0
    %223 = vmatpush1.bf16.msra.mxu0 0
    %224 = vmatprep.subr.bf16.mxu0 0
    %225 = vmatpush1.bf16.msra.mxu0 0
    %226 = vmatprep.subr.bf16.mxu0 0
    %227 = vmatpush1.bf16.msra.mxu0 0
    %228 = vmatprep.subr.bf16.mxu0 0
    %229 = vmatpush1.bf16.msra.mxu0 0
    %230 = vmatprep.subr.bf16.mxu0 0
    %231 = vmatpush1.bf16.msra.mxu0 0
    %232 = vmatprep.subr.bf16.mxu0 0
    %233 = vmatpush1.bf16.msra.mxu0 0
    %234 = vmatprep.subr.bf16.mxu0 0
    %235 = vmatpush1.bf16.msra.mxu0 0
    %236 = vmatprep.mubr.bf16.mxu0 0
    %237 = vmatmul.mubr.bf16.gmra.mrb[0].mxu0 %v202
    %v238 = vpop.f32.mrb[0].mxu0
    %v239 = vadd.f32 0.0, %v238
    %v240 = vpop.f32.mrb[0].mxu0
    %v241 = vpop.f32.mrb[0].mxu0
    %v242 = vadd.f32 0.0, %v241
    %v243 = vpop.f32.mrb[0].mxu0
    %244 = vdwg.mxu0
    %v245 = vld [vmem:[#allocation10] sm:$0xf]
    %v246 = vld [vmem:[#allocation10 + $0x4] sm:$0xf]
    %v247 = vld [vmem:[#allocation10 + $0x8] sm:$0xf]
    %v248 = vld [vmem:[#allocation10 + $0xc] sm:$0xf]
    %v253 = vunpack.c.l.b16 %v245
    %v254 = vunpack.c.l.b16 %v246
    %v255 = vunpack.c.l.b16 %v247
    %v256 = vunpack.c.l.b16 %v248
    %v257 = vpack.c.b16 %v254, %v253
    %v258 = vpack.c.b16 %v256, %v255
    %261 = vmatprep.subr.bf16.mxu0 0
    %262 = vmatpush1.bf16.msra.mxu0 %v257
    %263 = vmatprep.subr.bf16.mxu0 0
    %264 = vmatpush1.bf16.msra.mxu0 %v258
    %265 = vmatprep.subr.bf16.mxu0 0
    %266 = vmatpush1.bf16.msra.mxu0 0
    %267 = vmatprep.subr.bf16.mxu0 0
    %268 = vmatpush1.bf16.msra.mxu0 0
    %269 = vmatprep.subr.bf16.mxu0 0
    %270 = vmatpush1.bf16.msra.mxu0 0
    %271 = vmatprep.subr.bf16.mxu0 0
    %272 = vmatpush1.bf16.msra.mxu0 0
    %273 = vmatprep.subr.bf16.mxu0 0
    %274 = vmatpush1.bf16.msra.mxu0 0
    %275 = vmatprep.subr.bf16.mxu0 0
    %276 = vmatpush1.bf16.msra.mxu0 0
    %277 = vmatprep.subr.bf16.mxu0 0
    %278 = vmatpush1.bf16.msra.mxu0 0
    %279 = vmatprep.subr.bf16.mxu0 0
    %280 = vmatpush1.bf16.msra.mxu0 0
    %281 = vmatprep.subr.bf16.mxu0 0
    %282 = vmatpush1.bf16.msra.mxu0 0
    %283 = vmatprep.subr.bf16.mxu0 0
    %284 = vmatpush1.bf16.msra.mxu0 0
    %285 = vmatprep.subr.bf16.mxu0 0
    %286 = vmatpush1.bf16.msra.mxu0 0
    %287 = vmatprep.subr.bf16.mxu0 0
    %288 = vmatpush1.bf16.msra.mxu0 0
    %289 = vmatprep.subr.bf16.mxu0 0
    %290 = vmatpush1.bf16.msra.mxu0 0
    %291 = vmatprep.subr.bf16.mxu0 0
    %292 = vmatpush1.bf16.msra.mxu0 0
    %293 = vmatprep.mubr.bf16.mxu0 0
    %294 = vmatmul.mubr.bf16.gmra.mrb[0].mxu0 %v202
    %v295 = vpop.f32.mrb[0].mxu0
    %v296 = vadd.f32 0.0, %v295
    %v297 = vpop.f32.mrb[0].mxu0
    %v298 = vpop.f32.mrb[0].mxu0
    %v299 = vadd.f32 0.0, %v298
    %v300 = vpop.f32.mrb[0].mxu0
    %301 = vdwg.mxu0
    %v302 = vld [vmem:[%s6] sm:$0x1]
    %v304 = vlaneseq
    %v305 = vshrl.u32 %v304, 7
    %v306 = vsub.s32 0, %v305
    %v307 = vrot.slane %v302, %v306
    %v309 = vld [vmem:[#allocation11] sm:$0xf]
    %v310 = vld [vmem:[#allocation11 + $0x4] sm:$0xf]
    %v311 = vpack.c.bf16 %v174, %v174
    %v312 = vpack.c.bf16 %v239, %v239
    %v313 = vpack.c.bf16 %v296, %v296
    %vm314 = vcmask 130048
    %v316 = vsel %vm314, %v311, 0
    %v319 = vsel %vm314, %v312, 0
    %321 = vmatprep.subr.bf16.mxu0 0
    %322 = vmatpush1.bf16.xpose.msra.mxu0 %v319
    %323 = vmatprep.subr.bf16.mxu0 0
    %324 = vmatpush1.bf16.xpose.msra.mxu0 0
    %325 = vmatprep.subr.bf16.mxu0 0
    %326 = vmatpush1.bf16.xpose.msra.mxu0 0
    %327 = vmatprep.subr.bf16.mxu0 0
    %328 = vmatpush1.bf16.xpose.msra.mxu0 0
    %329 = vmatprep.subr.bf16.mxu0 0
    %330 = vmatpush1.bf16.xpose.msra.mxu0 0
    %331 = vmatprep.subr.bf16.mxu0 0
    %332 = vmatpush1.bf16.xpose.msra.mxu0 0
    %333 = vmatprep.subr.bf16.mxu0 0
    %334 = vmatpush1.bf16.xpose.msra.mxu0 0
    %335 = vmatprep.subr.bf16.mxu0 0
    %336 = vmatpush1.bf16.xpose.msra.mxu0 0
    %337 = vmatprep.subr.bf16.mxu0 0
    %338 = vmatpush1.bf16.xpose.msra.mxu0 0
    %339 = vmatprep.subr.bf16.mxu0 0
    %340 = vmatpush1.bf16.xpose.msra.mxu0 0
    %341 = vmatprep.subr.bf16.mxu0 0
    %342 = vmatpush1.bf16.xpose.msra.mxu0 0
    %343 = vmatprep.subr.bf16.mxu0 0
    %344 = vmatpush1.bf16.xpose.msra.mxu0 0
    %345 = vmatprep.subr.bf16.mxu0 0
    %346 = vmatpush1.bf16.xpose.msra.mxu0 0
    %347 = vmatprep.subr.bf16.mxu0 0
    %348 = vmatpush1.bf16.xpose.msra.mxu0 0
    %349 = vmatprep.subr.bf16.mxu0 0
    %350 = vmatpush1.bf16.xpose.msra.mxu0 0
    %351 = vmatprep.subr.bf16.mxu0 0
    %352 = vmatpush1.bf16.xpose.msra.mxu0 0
    %353 = vmatprep.mubr.bf16.mxu0 0
    %354 = vmatmul.mubr.bf16.gmra.mrb[0].mxu0 %v316
    %v355 = vpop.f32.mrb[0].mxu0
    %v356 = vadd.f32 0.0, %v355
    %v357 = vpop.f32.mrb[0].mxu0
    %v358 = vpop.f32.mrb[0].mxu0
    %v359 = vpop.f32.mrb[0].mxu0
    %360 = vdwg.mxu0
    %vm361 = vcmask 64512
    %v362 = vsel %vm361, %v356, -inf
    %363 = vmax.xlane.f32.xlu0 %v362
    %v364 = vpop.xlane.xlu0 %363
    %v365 = vsub.f32 %v356, %v364
    %v366 = vmul.f32 %v365, 1.442695
    %v367 = vpow.pop %v366
    %v368 = vsel %vm361, %v367, 0.0
    %369 = vadd.xlane.f32.xlu0 %v368
    %v370 = vpop.xlane.xlu0 %369
    %v371 = vrcp.pop %v370
    %v372 = vmul.f32 %v367, %v371
    %v373 = vpack.c.bf16 %v372, %v372
    %v375 = vsel %vm361, %v373, 0
    %vm377 = vcmask 1043456
    %v379 = vsel %vm377, %v313, 0
    %381 = vmatprep.subr.bf16.mxu0 0
    %382 = vmatpush1.bf16.msra.mxu0 %v379
    %383 = vmatprep.subr.bf16.mxu0 0
    %384 = vmatpush1.bf16.msra.mxu0 0
    %385 = vmatprep.subr.bf16.mxu0 0
    %386 = vmatpush1.bf16.msra.mxu0 0
    %387 = vmatprep.subr.bf16.mxu0 0
    %388 = vmatpush1.bf16.msra.mxu0 0
    %389 = vmatprep.subr.bf16.mxu0 0
    %390 = vmatpush1.bf16.msra.mxu0 0
    %391 = vmatprep.subr.bf16.mxu0 0
    %392 = vmatpush1.bf16.msra.mxu0 0
    %393 = vmatprep.subr.bf16.mxu0 0
    %394 = vmatpush1.bf16.msra.mxu0 0
    %395 = vmatprep.subr.bf16.mxu0 0
    %396 = vmatpush1.bf16.msra.mxu0 0
    %397 = vmatprep.subr.bf16.mxu0 0
    %398 = vmatpush1.bf16.msra.mxu0 0
    %399 = vmatprep.subr.bf16.mxu0 0
    %400 = vmatpush1.bf16.msra.mxu0 0
    %401 = vmatprep.subr.bf16.mxu0 0
    %402 = vmatpush1.bf16.msra.mxu0 0
    %403 = vmatprep.subr.bf16.mxu0 0
    %404 = vmatpush1.bf16.msra.mxu0 0
    %405 = vmatprep.subr.bf16.mxu0 0
    %406 = vmatpush1.bf16.msra.mxu0 0
    %407 = vmatprep.subr.bf16.mxu0 0
    %408 = vmatpush1.bf16.msra.mxu0 0
    %409 = vmatprep.subr.bf16.mxu0 0
    %410 = vmatpush1.bf16.msra.mxu0 0
    %411 = vmatprep.subr.bf16.mxu0 0
    %412 = vmatpush1.bf16.msra.mxu0 0
    %413 = vmatprep.mubr.bf16.mxu0 0
    %414 = vmatmul.mubr.bf16.gmra.mrb[0].mxu0 %v375
    %v415 = vpop.f32.mrb[0].mxu0
    %v416 = vadd.f32 0.0, %v415
    %v417 = vpop.f32.mrb[0].mxu0
    %v418 = vpop.f32.mrb[0].mxu0
    %v419 = vpop.f32.mrb[0].mxu0
    %420 = vdwg.mxu0
    %v421 = vpack.c.bf16 %v177, %v177
    %v422 = vpack.c.bf16 %v242, %v242
    %v423 = vpack.c.bf16 %v299, %v299
    %v425 = vsel %vm314, %v421, 0
    %v428 = vsel %vm314, %v422, 0
    %430 = vmatprep.subr.bf16.mxu0 0
    %431 = vmatpush1.bf16.xpose.msra.mxu0 %v428
    %432 = vmatprep.subr.bf16.mxu0 0
    %433 = vmatpush1.bf16.xpose.msra.mxu0 0
    %434 = vmatprep.subr.bf16.mxu0 0
    %435 = vmatpush1.bf16.xpose.msra.mxu0 0
    %436 = vmatprep.subr.bf16.mxu0 0
    %437 = vmatpush1.bf16.xpose.msra.mxu0 0
    %438 = vmatprep.subr.bf16.mxu0 0
    %439 = vmatpush1.bf16.xpose.msra.mxu0 0
    %440 = vmatprep.subr.bf16.mxu0 0
    %441 = vmatpush1.bf16.xpose.msra.mxu0 0
    %442 = vmatprep.subr.bf16.mxu0 0
    %443 = vmatpush1.bf16.xpose.msra.mxu0 0
    %444 = vmatprep.subr.bf16.mxu0 0
    %445 = vmatpush1.bf16.xpose.msra.mxu0 0
    %446 = vmatprep.subr.bf16.mxu0 0
    %447 = vmatpush1.bf16.xpose.msra.mxu0 0
    %448 = vmatprep.subr.bf16.mxu0 0
    %449 = vmatpush1.bf16.xpose.msra.mxu0 0
    %450 = vmatprep.subr.bf16.mxu0 0
    %451 = vmatpush1.bf16.xpose.msra.mxu0 0
    %452 = vmatprep.subr.bf16.mxu0 0
    %453 = vmatpush1.bf16.xpose.msra.mxu0 0
    %454 = vmatprep.subr.bf16.mxu0 0
    %455 = vmatpush1.bf16.xpose.msra.mxu0 0
    %456 = vmatprep.subr.bf16.mxu0 0
    %457 = vmatpush1.bf16.xpose.msra.mxu0 0
    %458 = vmatprep.subr.bf16.mxu0 0
    %459 = vmatpush1.bf16.xpose.msra.mxu0 0
    %460 = vmatprep.subr.bf16.mxu0 0
    %461 = vmatpush1.bf16.xpose.msra.mxu0 0
    %462 = vmatprep.mubr.bf16.mxu0 0
    %463 = vmatmul.mubr.bf16.gmra.mrb[0].mxu0 %v425
    %v464 = vpop.f32.mrb[0].mxu0
    %v465 = vadd.f32 0.0, %v464
    %v466 = vpop.f32.mrb[0].mxu0
    %v467 = vpop.f32.mrb[0].mxu0
    %v468 = vpop.f32.mrb[0].mxu0
    %469 = vdwg.mxu0
    %v470 = vsel %vm361, %v465, -inf
    %471 = vmax.xlane.f32.xlu0 %v470
    %v472 = vpop.xlane.xlu0 %471
    %v473 = vsub.f32 %v465, %v472
    %v474 = vmul.f32 %v473, 1.442695
    %v475 = vpow.pop %v474
    %v476 = vsel %vm361, %v475, 0.0
    %477 = vadd.xlane.f32.xlu0 %v476
    %v478 = vpop.xlane.xlu0 %477
    %v479 = vrcp.pop %v478
    %v480 = vmul.f32 %v475, %v479
    %v481 = vpack.c.bf16 %v480, %v480
    %v483 = vsel %vm361, %v481, 0
    %v486 = vsel %vm377, %v423, 0
    %488 = vmatprep.subr.bf16.mxu0 0
    %489 = vmatpush1.bf16.msra.mxu0 %v486
    %490 = vmatprep.subr.bf16.mxu0 0
    %491 = vmatpush1.bf16.msra.mxu0 0
    %492 = vmatprep.subr.bf16.mxu0 0
    %493 = vmatpush1.bf16.msra.mxu0 0
    %494 = vmatprep.subr.bf16.mxu0 0
    %495 = vmatpush1.bf16.msra.mxu0 0
    %496 = vmatprep.subr.bf16.mxu0 0
    %497 = vmatpush1.bf16.msra.mxu0 0
    %498 = vmatprep.subr.bf16.mxu0 0
    %499 = vmatpush1.bf16.msra.mxu0 0
    %500 = vmatprep.subr.bf16.mxu0 0
    %501 = vmatpush1.bf16.msra.mxu0 0
    %502 = vmatprep.subr.bf16.mxu0 0
    %503 = vmatpush1.bf16.msra.mxu0 0
    %504 = vmatprep.subr.bf16.mxu0 0
    %505 = vmatpush1.bf16.msra.mxu0 0
    %506 = vmatprep.subr.bf16.mxu0 0
    %507 = vmatpush1.bf16.msra.mxu0 0
    %508 = vmatprep.subr.bf16.mxu0 0
    %509 = vmatpush1.bf16.msra.mxu0 0
    %510 = vmatprep.subr.bf16.mxu0 0
    %511 = vmatpush1.bf16.msra.mxu0 0
    %512 = vmatprep.subr.bf16.mxu0 0
    %513 = vmatpush1.bf16.msra.mxu0 0
    %514 = vmatprep.subr.bf16.mxu0 0
    %515 = vmatpush1.bf16.msra.mxu0 0
    %516 = vmatprep.subr.bf16.mxu0 0
    %517 = vmatpush1.bf16.msra.mxu0 0
    %518 = vmatprep.subr.bf16.mxu0 0
    %519 = vmatpush1.bf16.msra.mxu0 0
    %520 = vmatprep.mubr.bf16.mxu0 0
    %521 = vmatmul.mubr.bf16.gmra.mrb[0].mxu0 %v483
    %v522 = vpop.f32.mrb[0].mxu0
    %v523 = vadd.f32 0.0, %v522
    %v524 = vpop.f32.mrb[0].mxu0
    %v525 = vpop.f32.mrb[0].mxu0
    %v526 = vpop.f32.mrb[0].mxu0
    %527 = vdwg.mxu0
    %v528 = vpack.c.bf16 %v523, %v416
    %v531 = vunpack.c.l.b16 %v309
    %v532 = vunpack.c.l.b16 %v310
    %v533 = vpack.c.b16 %v532, %v531
    %v536 = vsel %vm314, %v528, 0
    %538 = vmatprep.subr.bf16.mxu0 0
    %539 = vmatpush1.bf16.msra.mxu0 %v533
    %540 = vmatprep.subr.bf16.mxu0 0
    %541 = vmatpush1.bf16.msra.mxu0 0
    %542 = vmatprep.subr.bf16.mxu0 0
    %543 = vmatpush1.bf16.msra.mxu0 0
    %544 = vmatprep.subr.bf16.mxu0 0
    %545 = vmatpush1.bf16.msra.mxu0 0
    %546 = vmatprep.subr.bf16.mxu0 0
    %547 = vmatpush1.bf16.msra.mxu0 0
    %548 = vmatprep.subr.bf16.mxu0 0
    %549 = vmatpush1.bf16.msra.mxu0 0
    %550 = vmatprep.subr.bf16.mxu0 0
    %551 = vmatpush1.bf16.msra.mxu0 0
    %552 = vmatprep.subr.bf16.mxu0 0
    %553 = vmatpush1.bf16.msra.mxu0 0
    %554 = vmatprep.subr.bf16.mxu0 0
    %555 = vmatpush1.bf16.msra.mxu0 0
    %556 = vmatprep.subr.bf16.mxu0 0
    %557 = vmatpush1.bf16.msra.mxu0 0
    %558 = vmatprep.subr.bf16.mxu0 0
    %559 = vmatpush1.bf16.msra.mxu0 0
    %560 = vmatprep.subr.bf16.mxu0 0
    %561 = vmatpush1.bf16.msra.mxu0 0
    %562 = vmatprep.subr.bf16.mxu0 0
    %563 = vmatpush1.bf16.msra.mxu0 0
    %564 = vmatprep.subr.bf16.mxu0 0
    %565 = vmatpush1.bf16.msra.mxu0 0
    %566 = vmatprep.subr.bf16.mxu0 0
    %567 = vmatpush1.bf16.msra.mxu0 0
    %568 = vmatprep.subr.bf16.mxu0 0
    %569 = vmatpush1.bf16.msra.mxu0 0
    %570 = vmatprep.mubr.bf16.mxu0 0
    %571 = vmatmul.mubr.bf16.gmra.mrb[0].mxu0 %v536
    %v572 = vpop.f32.mrb[0].mxu0
    %v573 = vadd.f32 0.0, %v572
    %v574 = vpop.f32.mrb[0].mxu0
    %v575 = vpop.f32.mrb[0].mxu0
    %v576 = vadd.f32 0.0, %v575
    %v577 = vpop.f32.mrb[0].mxu0
    %578 = vdwg.mxu0
    %v579 = vadd.f32 %v307, %v573
    %v580 = vadd.f32 %v307, %v576
    %s581 = scalar_lea.vmem [#allocation11], 8
    %v582 = vld [vmem:[%s581] sm:$0xf]
    %v583 = vld [vmem:[%s581 + $0x4] sm:$0xf]
    %585 = vrot.lane.b32.xlu0 %v311, 112
    %v586 = vpop.permute.xlu0 %585
    %588 = vrot.lane.b32.xlu0 %v312, 112
    %v589 = vpop.permute.xlu0 %588
    %v591 = vsel %vm314, %v586, 0
    %v594 = vsel %vm314, %v589, 0
    %596 = vmatprep.subr.bf16.mxu0 0
    %597 = vmatpush1.bf16.xpose.msra.mxu0 %v594
    %598 = vmatprep.subr.bf16.mxu0 0
    %599 = vmatpush1.bf16.xpose.msra.mxu0 0
    %600 = vmatprep.subr.bf16.mxu0 0
    %601 = vmatpush1.bf16.xpose.msra.mxu0 0
    %602 = vmatprep.subr.bf16.mxu0 0
    %603 = vmatpush1.bf16.xpose.msra.mxu0 0
    %604 = vmatprep.subr.bf16.mxu0 0
    %605 = vmatpush1.bf16.xpose.msra.mxu0 0
    %606 = vmatprep.subr.bf16.mxu0 0
    %607 = vmatpush1.bf16.xpose.msra.mxu0 0
    %608 = vmatprep.subr.bf16.mxu0 0
    %609 = vmatpush1.bf16.xpose.msra.mxu0 0
    %610 = vmatprep.subr.bf16.mxu0 0
    %611 = vmatpush1.bf16.xpose.msra.mxu0 0
    %612 = vmatprep.subr.bf16.mxu0 0
    %613 = vmatpush1.bf16.xpose.msra.mxu0 0
    %614 = vmatprep.subr.bf16.mxu0 0
    %615 = vmatpush1.bf16.xpose.msra.mxu0 0
    %616 = vmatprep.subr.bf16.mxu0 0
    %617 = vmatpush1.bf16.xpose.msra.mxu0 0
    %618 = vmatprep.subr.bf16.mxu0 0
    %619 = vmatpush1.bf16.xpose.msra.mxu0 0
    %620 = vmatprep.subr.bf16.mxu0 0
    %621 = vmatpush1.bf16.xpose.msra.mxu0 0
    %622 = vmatprep.subr.bf16.mxu0 0
    %623 = vmatpush1.bf16.xpose.msra.mxu0 0
    %624 = vmatprep.subr.bf16.mxu0 0
    %625 = vmatpush1.bf16.xpose.msra.mxu0 0
    %626 = vmatprep.subr.bf16.mxu0 0
    %627 = vmatpush1.bf16.xpose.msra.mxu0 0
    %628 = vmatprep.mubr.bf16.mxu0 0
    %629 = vmatmul.mubr.bf16.gmra.mrb[0].mxu0 %v591
    %v630 = vpop.f32.mrb[0].mxu0
    %v631 = vadd.f32 0.0, %v630
    %v632 = vpop.f32.mrb[0].mxu0
    %v633 = vpop.f32.mrb[0].mxu0
    %v634 = vpop.f32.mrb[0].mxu0
    %635 = vdwg.mxu0
    %v636 = vsel %vm361, %v631, -inf
    %637 = vmax.xlane.f32.xlu0 %v636
    %v638 = vpop.xlane.xlu0 %637
    %v639 = vsub.f32 %v631, %v638
    %v640 = vmul.f32 %v639, 1.442695
    %v641 = vpow.pop %v640
    %v642 = vsel %vm361, %v641, 0.0
    %643 = vadd.xlane.f32.xlu0 %v642
    %v644 = vpop.xlane.xlu0 %643
    %v645 = vrcp.pop %v644
    %v646 = vmul.f32 %v641, %v645
    %v647 = vpack.c.bf16 %v646, %v646
    %649 = vrot.lane.b32.xlu0 %v313, 112
    %v650 = vpop.permute.xlu0 %649
    %v652 = vsel %vm361, %v647, 0
    %v655 = vsel %vm377, %v650, 0
    %657 = vmatprep.subr.bf16.mxu0 0
    %658 = vmatpush1.bf16.msra.mxu0 %v655
    %659 = vmatprep.subr.bf16.mxu0 0
    %660 = vmatpush1.bf16.msra.mxu0 0
    %661 = vmatprep.subr.bf16.mxu0 0
    %662 = vmatpush1.bf16.msra.mxu0 0
    %663 = vmatprep.subr.bf16.mxu0 0
    %664 = vmatpush1.bf16.msra.mxu0 0
    %665 = vmatprep.subr.bf16.mxu0 0
    %666 = vmatpush1.bf16.msra.mxu0 0
    %667 = vmatprep.subr.bf16.mxu0 0
    %668 = vmatpush1.bf16.msra.mxu0 0
    %669 = vmatprep.subr.bf16.mxu0 0
    %670 = vmatpush1.bf16.msra.mxu0 0
    %671 = vmatprep.subr.bf16.mxu0 0
    %672 = vmatpush1.bf16.msra.mxu0 0
    %673 = vmatprep.subr.bf16.mxu0 0
    %674 = vmatpush1.bf16.msra.mxu0 0
    %675 = vmatprep.subr.bf16.mxu0 0
    %676 = vmatpush1.bf16.msra.mxu0 0
    %677 = vmatprep.subr.bf16.mxu0 0
    %678 = vmatpush1.bf16.msra.mxu0 0
    %679 = vmatprep.subr.bf16.mxu0 0
    %680 = vmatpush1.bf16.msra.mxu0 0
    %681 = vmatprep.subr.bf16.mxu0 0
    %682 = vmatpush1.bf16.msra.mxu0 0
    %683 = vmatprep.subr.bf16.mxu0 0
    %684 = vmatpush1.bf16.msra.mxu0 0
    %685 = vmatprep.subr.bf16.mxu0 0
    %686 = vmatpush1.bf16.msra.mxu0 0
    %687 = vmatprep.subr.bf16.mxu0 0
    %688 = vmatpush1.bf16.msra.mxu0 0
    %689 = vmatprep.mubr.bf16.mxu0 0
    %690 = vmatmul.mubr.bf16.gmra.mrb[0].mxu0 %v652
    %v691 = vpop.f32.mrb[0].mxu0
    %v692 = vadd.f32 0.0, %v691
    %v693 = vpop.f32.mrb[0].mxu0
    %v694 = vpop.f32.mrb[0].mxu0
    %v695 = vpop.f32.mrb[0].mxu0
    %696 = vdwg.mxu0
    %698 = vrot.lane.b32.xlu0 %v421, 112
    %v699 = vpop.permute.xlu0 %698
    %701 = vrot.lane.b32.xlu0 %v422, 112
    %v702 = vpop.permute.xlu0 %701
    %v704 = vsel %vm314, %v699, 0
    %v707 = vsel %vm314, %v702, 0
    %709 = vmatprep.subr.bf16.mxu0 0
    %710 = vmatpush1.bf16.xpose.msra.mxu0 %v707
    %711 = vmatprep.subr.bf16.mxu0 0
    %712 = vmatpush1.bf16.xpose.msra.mxu0 0
    %713 = vmatprep.subr.bf16.mxu0 0
    %714 = vmatpush1.bf16.xpose.msra.mxu0 0
    %715 = vmatprep.subr.bf16.mxu0 0
    %716 = vmatpush1.bf16.xpose.msra.mxu0 0
    %717 = vmatprep.subr.bf16.mxu0 0
    %718 = vmatpush1.bf16.xpose.msra.mxu0 0
    %719 = vmatprep.subr.bf16.mxu0 0
    %720 = vmatpush1.bf16.xpose.msra.mxu0 0
    %721 = vmatprep.subr.bf16.mxu0 0
    %722 = vmatpush1.bf16.xpose.msra.mxu0 0
    %723 = vmatprep.subr.bf16.mxu0 0
    %724 = vmatpush1.bf16.xpose.msra.mxu0 0
    %725 = vmatprep.subr.bf16.mxu0 0
    %726 = vmatpush1.bf16.xpose.msra.mxu0 0
    %727 = vmatprep.subr.bf16.mxu0 0
    %728 = vmatpush1.bf16.xpose.msra.mxu0 0
    %729 = vmatprep.subr.bf16.mxu0 0
    %730 = vmatpush1.bf16.xpose.msra.mxu0 0
    %731 = vmatprep.subr.bf16.mxu0 0
    %732 = vmatpush1.bf16.xpose.msra.mxu0 0
    %733 = vmatprep.subr.bf16.mxu0 0
    %734 = vmatpush1.bf16.xpose.msra.mxu0 0
    %735 = vmatprep.subr.bf16.mxu0 0
    %736 = vmatpush1.bf16.xpose.msra.mxu0 0
    %737 = vmatprep.subr.bf16.mxu0 0
    %738 = vmatpush1.bf16.xpose.msra.mxu0 0
    %739 = vmatprep.subr.bf16.mxu0 0
    %740 = vmatpush1.bf16.xpose.msra.mxu0 0
    %741 = vmatprep.mubr.bf16.mxu0 0
    %742 = vmatmul.mubr.bf16.gmra.mrb[0].mxu0 %v704
    %v743 = vpop.f32.mrb[0].mxu0
    %v744 = vadd.f32 0.0, %v743
    %v745 = vpop.f32.mrb[0].mxu0
    %v746 = vpop.f32.mrb[0].mxu0
    %v747 = vpop.f32.mrb[0].mxu0
    %748 = vdwg.mxu0
    %v749 = vsel %vm361, %v744, -inf
    %750 = vmax.xlane.f32.xlu0 %v749
    %v751 = vpop.xlane.xlu0 %750
    %v752 = vsub.f32 %v744, %v751
    %v753 = vmul.f32 %v752, 1.442695
    %v754 = vpow.pop %v753
    %v755 = vsel %vm361, %v754, 0.0
    %756 = vadd.xlane.f32.xlu0 %v755
    %v757 = vpop.xlane.xlu0 %756
    %v758 = vrcp.pop %v757
    %v759 = vmul.f32 %v754, %v758
    %v760 = vpack.c.bf16 %v759, %v759
    %762 = vrot.lane.b32.xlu0 %v423, 112
    %v763 = vpop.permute.xlu0 %762
    %v765 = vsel %vm361, %v760, 0
    %v768 = vsel %vm377, %v763, 0
    %770 = vmatprep.subr.bf16.mxu0 0
    %771 = vmatpush1.bf16.msra.mxu0 %v768
    %772 = vmatprep.subr.bf16.mxu0 0
    %773 = vmatpush1.bf16.msra.mxu0 0
    %774 = vmatprep.subr.bf16.mxu0 0
    %775 = vmatpush1.bf16.msra.mxu0 0
    %776 = vmatprep.subr.bf16.mxu0 0
    %777 = vmatpush1.bf16.msra.mxu0 0
    %778 = vmatprep.subr.bf16.mxu0 0
    %779 = vmatpush1.bf16.msra.mxu0 0
    %780 = vmatprep.subr.bf16.mxu0 0
    %781 = vmatpush1.bf16.msra.mxu0 0
    %782 = vmatprep.subr.bf16.mxu0 0
    %783 = vmatpush1.bf16.msra.mxu0 0
    %784 = vmatprep.subr.bf16.mxu0 0
    %785 = vmatpush1.bf16.msra.mxu0 0
    %786 = vmatprep.subr.bf16.mxu0 0
    %787 = vmatpush1.bf16.msra.mxu0 0
    %788 = vmatprep.subr.bf16.mxu0 0
    %789 = vmatpush1.bf16.msra.mxu0 0
    %790 = vmatprep.subr.bf16.mxu0 0
    %791 = vmatpush1.bf16.msra.mxu0 0
    %792 = vmatprep.subr.bf16.mxu0 0
    %793 = vmatpush1.bf16.msra.mxu0 0
    %794 = vmatprep.subr.bf16.mxu0 0
    %795 = vmatpush1.bf16.msra.mxu0 0
    %796 = vmatprep.subr.bf16.mxu0 0
    %797 = vmatpush1.bf16.msra.mxu0 0
    %798 = vmatprep.subr.bf16.mxu0 0
    %799 = vmatpush1.bf16.msra.mxu0 0
    %800 = vmatprep.subr.bf16.mxu0 0
    %801 = vmatpush1.bf16.msra.mxu0 0
    %802 = vmatprep.mubr.bf16.mxu0 0
    %803 = vmatmul.mubr.bf16.gmra.mrb[0].mxu0 %v765
    %v804 = vpop.f32.mrb[0].mxu0
    %v805 = vadd.f32 0.0, %v804
    %v806 = vpop.f32.mrb[0].mxu0
    %v807 = vpop.f32.mrb[0].mxu0
    %v808 = vpop.f32.mrb[0].mxu0
    %809 = vdwg.mxu0
    %v810 = vpack.c.bf16 %v805, %v692
    %v813 = vunpack.c.l.b16 %v582
    %v814 = vunpack.c.l.b16 %v583
    %v815 = vpack.c.b16 %v814, %v813
    %v818 = vsel %vm314, %v810, 0
    %820 = vmatprep.subr.bf16.mxu0 0
    %821 = vmatpush1.bf16.msra.mxu0 %v815
    %822 = vmatprep.subr.bf16.mxu0 0
    %823 = vmatpush1.bf16.msra.mxu0 0
    %824 = vmatprep.subr.bf16.mxu0 0
    %825 = vmatpush1.bf16.msra.mxu0 0
    %826 = vmatprep.subr.bf16.mxu0 0
    %827 = vmatpush1.bf16.msra.mxu0 0
    %828 = vmatprep.subr.bf16.mxu0 0
    %829 = vmatpush1.bf16.msra.mxu0 0
    %830 = vmatprep.subr.bf16.mxu0 0
    %831 = vmatpush1.bf16.msra.mxu0 0
    %832 = vmatprep.subr.bf16.mxu0 0
    %833 = vmatpush1.bf16.msra.mxu0 0
    %834 = vmatprep.subr.bf16.mxu0 0
    %835 = vmatpush1.bf16.msra.mxu0 0
    %836 = vmatprep.subr.bf16.mxu0 0
    %837 = vmatpush1.bf16.msra.mxu0 0
    %838 = vmatprep.subr.bf16.mxu0 0
    %839 = vmatpush1.bf16.msra.mxu0 0
    %840 = vmatprep.subr.bf16.mxu0 0
    %841 = vmatpush1.bf16.msra.mxu0 0
    %842 = vmatprep.subr.bf16.mxu0 0
    %843 = vmatpush1.bf16.msra.mxu0 0
    %844 = vmatprep.subr.bf16.mxu0 0
    %845 = vmatpush1.bf16.msra.mxu0 0
    %846 = vmatprep.subr.bf16.mxu0 0
    %847 = vmatpush1.bf16.msra.mxu0 0
    %848 = vmatprep.subr.bf16.mxu0 0
    %849 = vmatpush1.bf16.msra.mxu0 0
    %850 = vmatprep.subr.bf16.mxu0 0
    %851 = vmatpush1.bf16.msra.mxu0 0
    %852 = vmatprep.mubr.bf16.mxu0 0
    %853 = vmatmul.mubr.bf16.gmra.mrb[0].mxu0 %v818
    %v854 = vpop.f32.mrb[0].mxu0
    %v855 = vadd.f32 0.0, %v854
    %v856 = vpop.f32.mrb[0].mxu0
    %v857 = vpop.f32.mrb[0].mxu0
    %v858 = vadd.f32 0.0, %v857
    %v859 = vpop.f32.mrb[0].mxu0
    %860 = vdwg.mxu0
    %v861 = vadd.f32 %v579, %v855
    %v862 = vadd.f32 %v580, %v858
    %s863 = scalar_lea.vmem [#allocation11], 16
    %v864 = vld [vmem:[%s863] sm:$0xf]
    %v865 = vld [vmem:[%s863 + $0x4] sm:$0xf]
    %866 = vrot.lane.b32.xlu0 %v311, 96
    %v867 = vpop.permute.xlu0 %866
    %868 = vrot.lane.b32.xlu0 %v312, 96
    %v869 = vpop.permute.xlu0 %868
    %v871 = vsel %vm314, %v867, 0
    %v874 = vsel %vm314, %v869, 0
    %876 = vmatprep.subr.bf16.mxu0 0
    %877 = vmatpush1.bf16.xpose.msra.mxu0 %v874
    %878 = vmatprep.subr.bf16.mxu0 0
    %879 = vmatpush1.bf16.xpose.msra.mxu0 0
    %880 = vmatprep.subr.bf16.mxu0 0
    %881 = vmatpush1.bf16.xpose.msra.mxu0 0
    %882 = vmatprep.subr.bf16.mxu0 0
    %883 = vmatpush1.bf16.xpose.msra.mxu0 0
    %884 = vmatprep.subr.bf16.mxu0 0
    %885 = vmatpush1.bf16.xpose.msra.mxu0 0
    %886 = vmatprep.subr.bf16.mxu0 0
    %887 = vmatpush1.bf16.xpose.msra.mxu0 0
    %888 = vmatprep.subr.bf16.mxu0 0
    %889 = vmatpush1.bf16.xpose.msra.mxu0 0
    %890 = vmatprep.subr.bf16.mxu0 0
    %891 = vmatpush1.bf16.xpose.msra.mxu0 0
    %892 = vmatprep.subr.bf16.mxu0 0
    %893 = vmatpush1.bf16.xpose.msra.mxu0 0
    %894 = vmatprep.subr.bf16.mxu0 0
    %895 = vmatpush1.bf16.xpose.msra.mxu0 0
    %896 = vmatprep.subr.bf16.mxu0 0
    %897 = vmatpush1.bf16.xpose.msra.mxu0 0
    %898 = vmatprep.subr.bf16.mxu0 0
    %899 = vmatpush1.bf16.xpose.msra.mxu0 0
    %900 = vmatprep.subr.bf16.mxu0 0
    %901 = vmatpush1.bf16.xpose.msra.mxu0 0
    %902 = vmatprep.subr.bf16.mxu0 0
    %903 = vmatpush1.bf16.xpose.msra.mxu0 0
    %904 = vmatprep.subr.bf16.mxu0 0
    %905 = vmatpush1.bf16.xpose.msra.mxu0 0
    %906 = vmatprep.subr.bf16.mxu0 0
    %907 = vmatpush1.bf16.xpose.msra.mxu0 0
    %908 = vmatprep.mubr.bf16.mxu0 0
    %909 = vmatmul.mubr.bf16.gmra.mrb[0].mxu0 %v871
    %v910 = vpop.f32.mrb[0].mxu0
    %v911 = vadd.f32 0.0, %v910
    %v912 = vpop.f32.mrb[0].mxu0
    %v913 = vpop.f32.mrb[0].mxu0
    %v914 = vpop.f32.mrb[0].mxu0
    %915 = vdwg.mxu0
    %v916 = vsel %vm361, %v911, -inf
    %917 = vmax.xlane.f32.xlu0 %v916
    %v918 = vpop.xlane.xlu0 %917
    %v919 = vsub.f32 %v911, %v918
    %v920 = vmul.f32 %v919, 1.442695
    %v921 = vpow.pop %v920
    %v922 = vsel %vm361, %v921, 0.0
    %923 = vadd.xlane.f32.xlu0 %v922
    %v924 = vpop.xlane.xlu0 %923
    %v925 = vrcp.pop %v924
    %v926 = vmul.f32 %v921, %v925
    %v927 = vpack.c.bf16 %v926, %v926
    %928 = vrot.lane.b32.xlu0 %v313, 96
    %v929 = vpop.permute.xlu0 %928
    %v931 = vsel %vm361, %v927, 0
    %v934 = vsel %vm377, %v929, 0
    %936 = vmatprep.subr.bf16.mxu0 0
    %937 = vmatpush1.bf16.msra.mxu0 %v934
    %938 = vmatprep.subr.bf16.mxu0 0
    %939 = vmatpush1.bf16.msra.mxu0 0
    %940 = vmatprep.subr.bf16.mxu0 0
    %941 = vmatpush1.bf16.msra.mxu0 0
    %942 = vmatprep.subr.bf16.mxu0 0
    %943 = vmatpush1.bf16.msra.mxu0 0
    %944 = vmatprep.subr.bf16.mxu0 0
    %945 = vmatpush1.bf16.msra.mxu0 0
    %946 = vmatprep.subr.bf16.mxu0 0
    %947 = vmatpush1.bf16.msra.mxu0 0
    %948 = vmatprep.subr.bf16.mxu0 0
    %949 = vmatpush1.bf16.msra.mxu0 0
    %950 = vmatprep.subr.bf16.mxu0 0
    %951 = vmatpush1.bf16.msra.mxu0 0
    %952 = vmatprep.subr.bf16.mxu0 0
    %953 = vmatpush1.bf16.msra.mxu0 0
    %954 = vmatprep.subr.bf16.mxu0 0
    %955 = vmatpush1.bf16.msra.mxu0 0
    %956 = vmatprep.subr.bf16.mxu0 0
    %957 = vmatpush1.bf16.msra.mxu0 0
    %958 = vmatprep.subr.bf16.mxu0 0
    %959 = vmatpush1.bf16.msra.mxu0 0
    %960 = vmatprep.subr.bf16.mxu0 0
    %961 = vmatpush1.bf16.msra.mxu0 0
    %962 = vmatprep.subr.bf16.mxu0 0
    %963 = vmatpush1.bf16.msra.mxu0 0
    %964 = vmatprep.subr.bf16.mxu0 0
    %965 = vmatpush1.bf16.msra.mxu0 0
    %966 = vmatprep.subr.bf16.mxu0 0
    %967 = vmatpush1.bf16.msra.mxu0 0
    %968 = vmatprep.mubr.bf16.mxu0 0
    %969 = vmatmul.mubr.bf16.gmra.mrb[0].mxu0 %v931
    %v970 = vpop.f32.mrb[0].mxu0
    %v971 = vadd.f32 0.0, %v970
    %v972 = vpop.f32.mrb[0].mxu0
    %v973 = vpop.f32.mrb[0].mxu0
    %v974 = vpop.f32.mrb[0].mxu0
    %975 = vdwg.mxu0
    %976 = vrot.lane.b32.xlu0 %v421, 96
    %v977 = vpop.permute.xlu0 %976
    %978 = vrot.lane.b32.xlu0 %v422, 96
    %v979 = vpop.permute.xlu0 %978
    %v981 = vsel %vm314, %v977, 0
    %v984 = vsel %vm314, %v979, 0
    %986 = vmatprep.subr.bf16.mxu0 0
    %987 = vmatpush1.bf16.xpose.msra.mxu0 %v984
    %988 = vmatprep.subr.bf16.mxu0 0
    %989 = vmatpush1.bf16.xpose.msra.mxu0 0
    %990 = vmatprep.subr.bf16.mxu0 0
    %991 = vmatpush1.bf16.xpose.msra.mxu0 0
    %992 = vmatprep.subr.bf16.mxu0 0
    %993 = vmatpush1.bf16.xpose.msra.mxu0 0
    %994 = vmatprep.subr.bf16.mxu0 0
    %995 = vmatpush1.bf16.xpose.msra.mxu0 0
    %996 = vmatprep.subr.bf16.mxu0 0
    %997 = vmatpush1.bf16.xpose.msra.mxu0 0
    %998 = vmatprep.subr.bf16.mxu0 0
    %999 = vmatpush1.bf16.xpose.msra.mxu0 0
    %1000 = vmatprep.subr.bf16.mxu0 0
    %1001 = vmatpush1.bf16.xpose.msra.mxu0 0
    %1002 = vmatprep.subr.bf16.mxu0 0
    %1003 = vmatpush1.bf16.xpose.msra.mxu0 0
    %1004 = vmatprep.subr.bf16.mxu0 0
    %1005 = vmatpush1.bf16.xpose.msra.mxu0 0
    %1006 = vmatprep.subr.bf16.mxu0 0
    %1007 = vmatpush1.bf16.xpose.msra.mxu0 0
    %1008 = vmatprep.subr.bf16.mxu0 0
    %1009 = vmatpush1.bf16.xpose.msra.mxu0 0
    %1010 = vmatprep.subr.bf16.mxu0 0
    %1011 = vmatpush1.bf16.xpose.msra.mxu0 0
    %1012 = vmatprep.subr.bf16.mxu0 0
    %1013 = vmatpush1.bf16.xpose.msra.mxu0 0
    %1014 = vmatprep.subr.bf16.mxu0 0
    %1015 = vmatpush1.bf16.xpose.msra.mxu0 0
    %1016 = vmatprep.subr.bf16.mxu0 0
    %1017 = vmatpush1.bf16.xpose.msra.mxu0 0
    %1018 = vmatprep.mubr.bf16.mxu0 0
    %1019 = vmatmul.mubr.bf16.gmra.mrb[0].mxu0 %v981
    %v1020 = vpop.f32.mrb[0].mxu0
    %v1021 = vadd.f32 0.0, %v1020
    %v1022 = vpop.f32.mrb[0].mxu0
    %v1023 = vpop.f32.mrb[0].mxu0
    %v1024 = vpop.f32.mrb[0].mxu0
    %1025 = vdwg.mxu0
    %v1026 = vsel %vm361, %v1021, -inf
    %1027 = vmax.xlane.f32.xlu0 %v1026
    %v1028 = vpop.xlane.xlu0 %1027
    %v1029 = vsub.f32 %v1021, %v1028
    %v1030 = vmul.f32 %v1029, 1.442695
    %v1031 = vpow.pop %v1030
    %v1032 = vsel %vm361, %v1031, 0.0
    %1033 = vadd.xlane.f32.xlu0 %v1032
    %v1034 = vpop.xlane.xlu0 %1033
    %v1035 = vrcp.pop %v1034
    %v1036 = vmul.f32 %v1031, %v1035
    %v1037 = vpack.c.bf16 %v1036, %v1036
    %1038 = vrot.lane.b32.xlu0 %v423, 96
    %v1039 = vpop.permute.xlu0 %1038
    %v1041 = vsel %vm361, %v1037, 0
    %v1044 = vsel %vm377, %v1039, 0
    %1046 = vmatprep.subr.bf16.mxu0 0
    %1047 = vmatpush1.bf16.msra.mxu0 %v1044
    %1048 = vmatprep.subr.bf16.mxu0 0
    %1049 = vmatpush1.bf16.msra.mxu0 0
    %1050 = vmatprep.subr.bf16.mxu0 0
    %1051 = vmatpush1.bf16.msra.mxu0 0
    %1052 = vmatprep.subr.bf16.mxu0 0
    %1053 = vmatpush1.bf16.msra.mxu0 0
    %1054 = vmatprep.subr.bf16.mxu0 0
    %1055 = vmatpush1.bf16.msra.mxu0 0
    %1056 = vmatprep.subr.bf16.mxu0 0
    %1057 = vmatpush1.bf16.msra.mxu0 0
    %1058 = vmatprep.subr.bf16.mxu0 0
    %1059 = vmatpush1.bf16.msra.mxu0 0
    %1060 = vmatprep.subr.bf16.mxu0 0
    %1061 = vmatpush1.bf16.msra.mxu0 0
    %1062 = vmatprep.subr.bf16.mxu0 0
    %1063 = vmatpush1.bf16.msra.mxu0 0
    %1064 = vmatprep.subr.bf16.mxu0 0
    %1065 = vmatpush1.bf16.msra.mxu0 0
    %1066 = vmatprep.subr.bf16.mxu0 0
    %1067 = vmatpush1.bf16.msra.mxu0 0
    %1068 = vmatprep.subr.bf16.mxu0 0
    %1069 = vmatpush1.bf16.msra.mxu0 0
    %1070 = vmatprep.subr.bf16.mxu0 0
    %1071 = vmatpush1.bf16.msra.mxu0 0
    %1072 = vmatprep.subr.bf16.mxu0 0
    %1073 = vmatpush1.bf16.msra.mxu0 0
    %1074 = vmatprep.subr.bf16.mxu0 0
    %1075 = vmatpush1.bf16.msra.mxu0 0
    %1076 = vmatprep.subr.bf16.mxu0 0
    %1077 = vmatpush1.bf16.msra.mxu0 0
    %1078 = vmatprep.mubr.bf16.mxu0 0
    %1079 = vmatmul.mubr.bf16.gmra.mrb[0].mxu0 %v1041
    %v1080 = vpop.f32.mrb[0].mxu0
    %v1081 = vadd.f32 0.0, %v1080
    %v1082 = vpop.f32.mrb[0].mxu0
    %v1083 = vpop.f32.mrb[0].mxu0
    %v1084 = vpop.f32.mrb[0].mxu0
    %1085 = vdwg.mxu0
    %v1086 = vpack.c.bf16 %v1081, %v971
    %v1089 = vunpack.c.l.b16 %v864
    %v1090 = vunpack.c.l.b16 %v865
    %v1091 = vpack.c.b16 %v1090, %v1089
    %v1094 = vsel %vm314, %v1086, 0
    %1096 = vmatprep.subr.bf16.mxu0 0
    %1097 = vmatpush1.bf16.msra.mxu0 %v1091
    %1098 = vmatprep.subr.bf16.mxu0 0
    %1099 = vmatpush1.bf16.msra.mxu0 0
    %1100 = vmatprep.subr.bf16.mxu0 0
    %1101 = vmatpush1.bf16.msra.mxu0 0
    %1102 = vmatprep.subr.bf16.mxu0 0
    %1103 = vmatpush1.bf16.msra.mxu0 0
    %1104 = vmatprep.subr.bf16.mxu0 0
    %1105 = vmatpush1.bf16.msra.mxu0 0
    %1106 = vmatprep.subr.bf16.mxu0 0
    %1107 = vmatpush1.bf16.msra.mxu0 0
    %1108 = vmatprep.subr.bf16.mxu0 0
    %1109 = vmatpush1.bf16.msra.mxu0 0
    %1110 = vmatprep.subr.bf16.mxu0 0
    %1111 = vmatpush1.bf16.msra.mxu0 0
    %1112 = vmatprep.subr.bf16.mxu0 0
    %1113 = vmatpush1.bf16.msra.mxu0 0
    %1114 = vmatprep.subr.bf16.mxu0 0
    %1115 = vmatpush1.bf16.msra.mxu0 0
    %1116 = vmatprep.subr.bf16.mxu0 0
    %1117 = vmatpush1.bf16.msra.mxu0 0
    %1118 = vmatprep.subr.bf16.mxu0 0
    %1119 = vmatpush1.bf16.msra.mxu0 0
    %1120 = vmatprep.subr.bf16.mxu0 0
    %1121 = vmatpush1.bf16.msra.mxu0 0
    %1122 = vmatprep.subr.bf16.mxu0 0
    %1123 = vmatpush1.bf16.msra.mxu0 0
    %1124 = vmatprep.subr.bf16.mxu0 0
    %1125 = vmatpush1.bf16.msra.mxu0 0
    %1126 = vmatprep.subr.bf16.mxu0 0
    %1127 = vmatpush1.bf16.msra.mxu0 0
    %1128 = vmatprep.mubr.bf16.mxu0 0
    %1129 = vmatmul.mubr.bf16.gmra.mrb[0].mxu0 %v1094
    %v1130 = vpop.f32.mrb[0].mxu0
    %v1131 = vadd.f32 0.0, %v1130
    %v1132 = vpop.f32.mrb[0].mxu0
    %v1133 = vpop.f32.mrb[0].mxu0
    %v1134 = vadd.f32 0.0, %v1133
    %v1135 = vpop.f32.mrb[0].mxu0
    %1136 = vdwg.mxu0
    %v1137 = vadd.f32 %v861, %v1131
    %v1138 = vadd.f32 %v862, %v1134
    %s1139 = scalar_lea.vmem [#allocation11], 24
    %v1140 = vld [vmem:[%s1139] sm:$0xf]
    %v1141 = vld [vmem:[%s1139 + $0x4] sm:$0xf]
    %1142 = vrot.lane.b32.xlu0 %v311, 80
    %v1143 = vpop.permute.xlu0 %1142
    %1144 = vrot.lane.b32.xlu0 %v312, 80
    %v1145 = vpop.permute.xlu0 %1144
    %v1147 = vsel %vm314, %v1143, 0
    %v1150 = vsel %vm314, %v1145, 0
    %1152 = vmatprep.subr.bf16.mxu0 0
    %1153 = vmatpush1.bf16.xpose.msra.mxu0 %v1150
    %1154 = vmatprep.subr.bf16.mxu0 0
    %1155 = vmatpush1.bf16.xpose.msra.mxu0 0
    %1156 = vmatprep.subr.bf16.mxu0 0
    %1157 = vmatpush1.bf16.xpose.msra.mxu0 0
    %1158 = vmatprep.subr.bf16.mxu0 0
    %1159 = vmatpush1.bf16.xpose.msra.mxu0 0
    %1160 = vmatprep.subr.bf16.mxu0 0
    %1161 = vmatpush1.bf16.xpose.msra.mxu0 0
    %1162 = vmatprep.subr.bf16.mxu0 0
    %1163 = vmatpush1.bf16.xpose.msra.mxu0 0
    %1164 = vmatprep.subr.bf16.mxu0 0
    %1165 = vmatpush1.bf16.xpose.msra.mxu0 0
    %1166 = vmatprep.subr.bf16.mxu0 0
    %1167 = vmatpush1.bf16.xpose.msra.mxu0 0
    %1168 = vmatprep.subr.bf16.mxu0 0
    %1169 = vmatpush1.bf16.xpose.msra.mxu0 0
    %1170 = vmatprep.subr.bf16.mxu0 0
    %1171 = vmatpush1.bf16.xpose.msra.mxu0 0
    %1172 = vmatprep.subr.bf16.mxu0 0
    %1173 = vmatpush1.bf16.xpose.msra.mxu0 0
    %1174 = vmatprep.subr.bf16.mxu0 0
    %1175 = vmatpush1.bf16.xpose.msra.mxu0 0
    %1176 = vmatprep.subr.bf16.mxu0 0
    %1177 = vmatpush1.bf16.xpose.msra.mxu0 0
    %1178 = vmatprep.subr.bf16.mxu0 0
    %1179 = vmatpush1.bf16.xpose.msra.mxu0 0
    %1180 = vmatprep.subr.bf16.mxu0 0
    %1181 = vmatpush1.bf16.xpose.msra.mxu0 0
    %1182 = vmatprep.subr.bf16.mxu0 0
    %1183 = vmatpush1.bf16.xpose.msra.mxu0 0
    %1184 = vmatprep.mubr.bf16.mxu0 0
    %1185 = vmatmul.mubr.bf16.gmra.mrb[0].mxu0 %v1147
    %v1186 = vpop.f32.mrb[0].mxu0
    %v1187 = vadd.f32 0.0, %v1186
    %v1188 = vpop.f32.mrb[0].mxu0
    %v1189 = vpop.f32.mrb[0].mxu0
    %v1190 = vpop.f32.mrb[0].mxu0
    %1191 = vdwg.mxu0
    %v1192 = vsel %vm361, %v1187, -inf
    %1193 = vmax.xlane.f32.xlu0 %v1192
    %v1194 = vpop.xlane.xlu0 %1193
    %v1195 = vsub.f32 %v1187, %v1194
    %v1196 = vmul.f32 %v1195, 1.442695
    %v1197 = vpow.pop %v1196
    %v1198 = vsel %vm361, %v1197, 0.0
    %1199 = vadd.xlane.f32.xlu0 %v1198
    %v1200 = vpop.xlane.xlu0 %1199
    %v1201 = vrcp.pop %v1200
    %v1202 = vmul.f32 %v1197, %v1201
    %v1203 = vpack.c.bf16 %v1202, %v1202
    %1204 = vrot.lane.b32.xlu0 %v313, 80
    %v1205 = vpop.permute.xlu0 %1204
    %v1207 = vsel %vm361, %v1203, 0
    %v1210 = vsel %vm377, %v1205, 0
    %1212 = vmatprep.subr.bf16.mxu0 0
    %1213 = vmatpush1.bf16.msra.mxu0 %v1210
    %1214 = vmatprep.subr.bf16.mxu0 0
    %1215 = vmatpush1.bf16.msra.mxu0 0
    %1216 = vmatprep.subr.bf16.mxu0 0
    %1217 = vmatpush1.bf16.msra.mxu0 0
    %1218 = vmatprep.subr.bf16.mxu0 0
    %1219 = vmatpush1.bf16.msra.mxu0 0
    %1220 = vmatprep.subr.bf16.mxu0 0
    %1221 = vmatpush1.bf16.msra.mxu0 0
    %1222 = vmatprep.subr.bf16.mxu0 0
    %1223 = vmatpush1.bf16.msra.mxu0 0
    %1224 = vmatprep.subr.bf16.mxu0 0
    %1225 = vmatpush1.bf16.msra.mxu0 0
    %1226 = vmatprep.subr.bf16.mxu0 0
    %1227 = vmatpush1.bf16.msra.mxu0 0
    %1228 = vmatprep.subr.bf16.mxu0 0
    %1229 = vmatpush1.bf16.msra.mxu0 0
    %1230 = vmatprep.subr.bf16.mxu0 0
    %1231 = vmatpush1.bf16.msra.mxu0 0
    %1232 = vmatprep.subr.bf16.mxu0 0
    %1233 = vmatpush1.bf16.msra.mxu0 0
    %1234 = vmatprep.subr.bf16.mxu0 0
    %1235 = vmatpush1.bf16.msra.mxu0 0
    %1236 = vmatprep.subr.bf16.mxu0 0
    %1237 = vmatpush1.bf16.msra.mxu0 0
    %1238 = vmatprep.subr.bf16.mxu0 0
    %1239 = vmatpush1.bf16.msra.mxu0 0
    %1240 = vmatprep.subr.bf16.mxu0 0
    %1241 = vmatpush1.bf16.msra.mxu0 0
    %1242 = vmatprep.subr.bf16.mxu0 0
    %1243 = vmatpush1.bf16.msra.mxu0 0
    %1244 = vmatprep.mubr.bf16.mxu0 0
    %1245 = vmatmul.mubr.bf16.gmra.mrb[0].mxu0 %v1207
    %v1246 = vpop.f32.mrb[0].mxu0
    %v1247 = vadd.f32 0.0, %v1246
    %v1248 = vpop.f32.mrb[0].mxu0
    %v1249 = vpop.f32.mrb[0].mxu0
    %v1250 = vpop.f32.mrb[0].mxu0
    %1251 = vdwg.mxu0
    %1252 = vrot.lane.b32.xlu0 %v421, 80
    %v1253 = vpop.permute.xlu0 %1252
    %1254 = vrot.lane.b32.xlu0 %v422, 80
    %v1255 = vpop.permute.xlu0 %1254
    %v1257 = vsel %vm314, %v1253, 0
    %v1260 = vsel %vm314, %v1255, 0
    %1262 = vmatprep.subr.bf16.mxu0 0
    %1263 = vmatpush1.bf16.xpose.msra.mxu0 %v1260
    %1264 = vmatprep.subr.bf16.mxu0 0
    %1265 = vmatpush1.bf16.xpose.msra.mxu0 0
    %1266 = vmatprep.subr.bf16.mxu0 0
    %1267 = vmatpush1.bf16.xpose.msra.mxu0 0
    %1268 = vmatprep.subr.bf16.mxu0 0
    %1269 = vmatpush1.bf16.xpose.msra.mxu0 0
    %1270 = vmatprep.subr.bf16.mxu0 0
    %1271 = vmatpush1.bf16.xpose.msra.mxu0 0
    %1272 = vmatprep.subr.bf16.mxu0 0
    %1273 = vmatpush1.bf16.xpose.msra.mxu0 0
    %1274 = vmatprep.subr.bf16.mxu0 0
    %1275 = vmatpush1.bf16.xpose.msra.mxu0 0
    %1276 = vmatprep.subr.bf16.mxu0 0
    %1277 = vmatpush1.bf16.xpose.msra.mxu0 0
    %1278 = vmatprep.subr.bf16.mxu0 0
    %1279 = vmatpush1.bf16.xpose.msra.mxu0 0
    %1280 = vmatprep.subr.bf16.mxu0 0
    %1281 = vmatpush1.bf16.xpose.msra.mxu0 0
    %1282 = vmatprep.subr.bf16.mxu0 0
    %1283 = vmatpush1.bf16.xpose.msra.mxu0 0
    %1284 = vmatprep.subr.bf16.mxu0 0
    %1285 = vmatpush1.bf16.xpose.msra.mxu0 0
    %1286 = vmatprep.subr.bf16.mxu0 0
    %1287 = vmatpush1.bf16.xpose.msra.mxu0 0
    %1288 = vmatprep.subr.bf16.mxu0 0
    %1289 = vmatpush1.bf16.xpose.msra.mxu0 0
    %1290 = vmatprep.subr.bf16.mxu0 0
    %1291 = vmatpush1.bf16.xpose.msra.mxu0 0
    %1292 = vmatprep.subr.bf16.mxu0 0
    %1293 = vmatpush1.bf16.xpose.msra.mxu0 0
    %1294 = vmatprep.mubr.bf16.mxu0 0
    %1295 = vmatmul.mubr.bf16.gmra.mrb[0].mxu0 %v1257
    %v1296 = vpop.f32.mrb[0].mxu0
    %v1297 = vadd.f32 0.0, %v1296
    %v1298 = vpop.f32.mrb[0].mxu0
    %v1299 = vpop.f32.mrb[0].mxu0
    %v1300 = vpop.f32.mrb[0].mxu0
    %1301 = vdwg.mxu0
    %v1302 = vsel %vm361, %v1297, -inf
    %1303 = vmax.xlane.f32.xlu0 %v1302
    %v1304 = vpop.xlane.xlu0 %1303
    %v1305 = vsub.f32 %v1297, %v1304
    %v1306 = vmul.f32 %v1305, 1.442695
    %v1307 = vpow.pop %v1306
    %v1308 = vsel %vm361, %v1307, 0.0
    %1309 = vadd.xlane.f32.xlu0 %v1308
    %v1310 = vpop.xlane.xlu0 %1309
    %v1311 = vrcp.pop %v1310
    %v1312 = vmul.f32 %v1307, %v1311
    %v1313 = vpack.c.bf16 %v1312, %v1312
    %1314 = vrot.lane.b32.xlu0 %v423, 80
    %v1315 = vpop.permute.xlu0 %1314
    %v1317 = vsel %vm361, %v1313, 0
    %v1320 = vsel %vm377, %v1315, 0
    %1322 = vmatprep.subr.bf16.mxu0 0
    %1323 = vmatpush1.bf16.msra.mxu0 %v1320
    %1324 = vmatprep.subr.bf16.mxu0 0
    %1325 = vmatpush1.bf16.msra.mxu0 0
    %1326 = vmatprep.subr.bf16.mxu0 0
    %1327 = vmatpush1.bf16.msra.mxu0 0
    %1328 = vmatprep.subr.bf16.mxu0 0
    %1329 = vmatpush1.bf16.msra.mxu0 0
    %1330 = vmatprep.subr.bf16.mxu0 0
    %1331 = vmatpush1.bf16.msra.mxu0 0
    %1332 = vmatprep.subr.bf16.mxu0 0
    %1333 = vmatpush1.bf16.msra.mxu0 0
    %1334 = vmatprep.subr.bf16.mxu0 0
    %1335 = vmatpush1.bf16.msra.mxu0 0
    %1336 = vmatprep.subr.bf16.mxu0 0
    %1337 = vmatpush1.bf16.msra.mxu0 0
    %1338 = vmatprep.subr.bf16.mxu0 0
    %1339 = vmatpush1.bf16.msra.mxu0 0
    %1340 = vmatprep.subr.bf16.mxu0 0
    %1341 = vmatpush1.bf16.msra.mxu0 0
    %1342 = vmatprep.subr.bf16.mxu0 0
    %1343 = vmatpush1.bf16.msra.mxu0 0
    %1344 = vmatprep.subr.bf16.mxu0 0
    %1345 = vmatpush1.bf16.msra.mxu0 0
    %1346 = vmatprep.subr.bf16.mxu0 0
    %1347 = vmatpush1.bf16.msra.mxu0 0
    %1348 = vmatprep.subr.bf16.mxu0 0
    %1349 = vmatpush1.bf16.msra.mxu0 0
    %1350 = vmatprep.subr.bf16.mxu0 0
    %1351 = vmatpush1.bf16.msra.mxu0 0
    %1352 = vmatprep.subr.bf16.mxu0 0
    %1353 = vmatpush1.bf16.msra.mxu0 0
    %1354 = vmatprep.mubr.bf16.mxu0 0
    %1355 = vmatmul.mubr.bf16.gmra.mrb[0].mxu0 %v1317
    %v1356 = vpop.f32.mrb[0].mxu0
    %v1357 = vadd.f32 0.0, %v1356
    %v1358 = vpop.f32.mrb[0].mxu0
    %v1359 = vpop.f32.mrb[0].mxu0
    %v1360 = vpop.f32.mrb[0].mxu0
    %1361 = vdwg.mxu0
    %v1362 = vpack.c.bf16 %v1357, %v1247
    %v1365 = vunpack.c.l.b16 %v1140
    %v1366 = vunpack.c.l.b16 %v1141
    %v1367 = vpack.c.b16 %v1366, %v1365
    %v1370 = vsel %vm314, %v1362, 0
    %1372 = vmatprep.subr.bf16.mxu0 0
    %1373 = vmatpush1.bf16.msra.mxu0 %v1367
    %1374 = vmatprep.subr.bf16.mxu0 0
    %1375 = vmatpush1.bf16.msra.mxu0 0
    %1376 = vmatprep.subr.bf16.mxu0 0
    %1377 = vmatpush1.bf16.msra.mxu0 0
    %1378 = vmatprep.subr.bf16.mxu0 0
    %1379 = vmatpush1.bf16.msra.mxu0 0
    %1380 = vmatprep.subr.bf16.mxu0 0
    %1381 = vmatpush1.bf16.msra.mxu0 0
    %1382 = vmatprep.subr.bf16.mxu0 0
    %1383 = vmatpush1.bf16.msra.mxu0 0
    %1384 = vmatprep.subr.bf16.mxu0 0
    %1385 = vmatpush1.bf16.msra.mxu0 0
    %1386 = vmatprep.subr.bf16.mxu0 0
    %1387 = vmatpush1.bf16.msra.mxu0 0
    %1388 = vmatprep.subr.bf16.mxu0 0
    %1389 = vmatpush1.bf16.msra.mxu0 0
    %1390 = vmatprep.subr.bf16.mxu0 0
    %1391 = vmatpush1.bf16.msra.mxu0 0
    %1392 = vmatprep.subr.bf16.mxu0 0
    %1393 = vmatpush1.bf16.msra.mxu0 0
    %1394 = vmatprep.subr.bf16.mxu0 0
    %1395 = vmatpush1.bf16.msra.mxu0 0
    %1396 = vmatprep.subr.bf16.mxu0 0
    %1397 = vmatpush1.bf16.msra.mxu0 0
    %1398 = vmatprep.subr.bf16.mxu0 0
    %1399 = vmatpush1.bf16.msra.mxu0 0
    %1400 = vmatprep.subr.bf16.mxu0 0
    %1401 = vmatpush1.bf16.msra.mxu0 0
    %1402 = vmatprep.subr.bf16.mxu0 0
    %1403 = vmatpush1.bf16.msra.mxu0 0
    %1404 = vmatprep.mubr.bf16.mxu0 0
    %1405 = vmatmul.mubr.bf16.gmra.mrb[0].mxu0 %v1370
    %v1406 = vpop.f32.mrb[0].mxu0
    %v1407 = vadd.f32 0.0, %v1406
    %v1408 = vpop.f32.mrb[0].mxu0
    %v1409 = vpop.f32.mrb[0].mxu0
    %v1410 = vadd.f32 0.0, %v1409
    %v1411 = vpop.f32.mrb[0].mxu0
    %1412 = vdwg.mxu0
    %v1413 = vadd.f32 %v1137, %v1407
    %v1414 = vadd.f32 %v1138, %v1410
    %1415 = vst.msk [vmem:[#allocation13] sm:$0xff] %vm135, %v1413
    %1416 = vst.msk [vmem:[#allocation13 + $0x8] sm:$0xff] %vm135, %v1414
    // Predicated region
    $region54: #{tpu_custom_call.1} parent=1 // pred_check
      _
    $region55: #{tpu_custom_call.1} parent=1 // pred_check_branch
      %1418 = sbr.rel (0) target = $region57
    $region56: #{tpu_custom_call.1} parent=1 // pred_region
      %s1420 = ssub.s32 256, 256
      %1421 = vsyncadd [#allocation4], %s1420
      %s1422 = sshll.u32 [#allocation13], 4
      %s1423 = int_to_ptr.vmem [resolvable:$true] %s1422
      %1428 = dma.vmem_to_hbm [thread:$0]  %s1423, 256, %s7, [#allocation4], 128, 128, 8
    $region57: #{tpu_custom_call.1} parent=1 // pred_fallthru
      _
    // Predicated region
    $region58: #{tpu_custom_call.1} parent=1 // pred_check
      _
    $region59: #{tpu_custom_call.1} parent=1 // pred_check_branch
      %1430 = sbr.rel (0) target = $region61
    $region60: #{tpu_custom_call.1} parent=1 // pred_region
      %1431 = dma.done [#allocation4], 256
    $region61: #{tpu_custom_call.1} parent=1 // pred_fallthru
      _
    %1432 = vsyncpa [#allocation3], 1
    %1433 = vsyncpa [#allocation6], 1
    %1434 = vsyncpa [#allocation9], 1
    %1435 = vsyncpa [#allocation12], 1
    %1436 = vsyncpa [#allocation4], 1

</llo_original>
